<compile_context>
chip_gen: v7x
topology: tpu7x:2x2x1
jax: 0.10.0
libtpu: 0.0.40
codegen_flags: <defaults>
</compile_context>

<pallas_src>
import functools

import jax
import jax.numpy as jnp
from jax import lax
from jax.experimental import pallas as pl
from jax.experimental.pallas import tpu as pltpu


def _round_up(n, m):
    return ((n + m - 1) // m) * m


def _largest_divisor_leq(n, cap):
    for d in range(min(n, cap), 0, -1):
        if n % d == 0:
            return d
    return 1


def _bilstm_cls_kernel(x_ref,       # (T, TB, 2E)  mxu_dtype   paired [x[s] | x[T-1-s]]
                       wx_ref,      # (2E, 8H)     mxu_dtype   block input-proj weights
                       bx_ref,      # (1, 8H)      f32         fused biases (both dirs)
                       wrec_ref,    # (2H, 8H)     mxu_dtype   block-diag recurrent weights
                       wc_ref,      # (2H, 4)      mxu_dtype   block-diag classifier
                       bc_ref,      # (1, 4)       f32         [b0, b1, 0, 0]
                       out_ref,     # (T, TB, 4)   f32         [fwd logits | bwd logits (rev)]
                       gx_ref,      # scratch (T, TB, 8H) mxu_dtype: pre-aligned gate pre-acts
                       hist_ref,    # scratch (T, TB, 2H) mxu_dtype: hidden-state history
                       *, t_chunk, unroll):
    T, TB, _ = x_ref.shape
    G = wx_ref.shape[1]          # 8 * H
    H2 = wrec_ref.shape[0]       # 2 * H
    H = H2 // 2
    f32 = jnp.float32
    n_chunks = T // t_chunk

    # ---- prologue: T-chunked batched input projection (both dirs, already aligned) ----
    wx = wx_ref[...]
    bx = bx_ref[...]

    def proj_chunk(ci, carry):
        r0 = pl.multiple_of(ci * t_chunk, t_chunk)
        xc = x_ref[pl.ds(r0, t_chunk)].reshape(t_chunk * TB, x_ref.shape[2])
        g = jnp.dot(xc, wx, preferred_element_type=f32) + bx
        gx_ref[pl.ds(r0, t_chunk)] = g.reshape(t_chunk, TB, G).astype(gx_ref.dtype)
        return carry

    lax.fori_loop(0, n_chunks, proj_chunk, 0, unroll=False)

    # ---- serial lockstep recurrence (fwd + bwd fused in one 8H-wide matmul) ----
    w_rec = wrec_ref[...]

    def step(s, carry):
        h, c = carry                                                   # h mxu_dtype, c f32
        rec = jnp.dot(h, w_rec, preferred_element_type=f32)            # (TB, 8H)
        gates = rec + gx_ref[s].astype(f32)                            # single aligned load
        sg = jax.nn.sigmoid(gates[:, :6 * H])                          # i | f | o (both dirs)
        g_g = jnp.tanh(gates[:, 6 * H:])                               # g       (both dirs)
        i_g = sg[:, :2 * H]
        f_g = sg[:, 2 * H:4 * H]
        o_g = sg[:, 4 * H:]
        c_new = f_g * c + i_g * g_g                                    # f32 state
        h_new = (o_g * jnp.tanh(c_new)).astype(hist_ref.dtype)
        hist_ref[s] = h_new                                            # ONE full-width store
        return h_new, c_new

    h0 = jnp.zeros((TB, H2), hist_ref.dtype)
    c0 = jnp.zeros((TB, H2), f32)
    lax.fori_loop(0, T, step, (h0, c0), unroll=unroll)

    # ---- epilogue: T-chunked deferred classifier matmul ----
    wc = wc_ref[...]
    bc = bc_ref[...]

    def cls_chunk(ci, carry):
        r0 = pl.multiple_of(ci * t_chunk, t_chunk)
        hh = hist_ref[pl.ds(r0, t_chunk)].reshape(t_chunk * TB, H2)
        lg = jnp.dot(hh, wc, preferred_element_type=f32) + bc
        out_ref[pl.ds(r0, t_chunk)] = lg.reshape(t_chunk, TB, 4)
        return carry

    # TODO(synk): for very large T*TB, emit the logits with a lane-dense layout
    # (e.g. (T, 4, TB)) to avoid masked width-4 stores.
    lax.fori_loop(0, n_chunks, cls_chunk, 0, unroll=False)


def _reorder_gates_ifog(w):
    """Reorder torch gate-row order [i, f, g, o] -> kernel order [i, f, o, g]."""
    H = w.shape[0] // 4
    return jnp.concatenate([w[:H], w[H:2 * H], w[3 * H:], w[2 * H:3 * H]], axis=0)


def prepare_kernel_weights(params, mxu_dtype):
    """Pre-transpose / pre-arrange weights once, outside the kernel."""
    H = params["w_hh_f"].shape[1]
    E = params["w_ih_f"].shape[1]

    wihf = _reorder_gates_ifog(params["w_ih_f"])                  # (4H, E), gates i,f,o,g
    wihb = _reorder_gates_ifog(params["w_ih_b"])
    whhf = _reorder_gates_ifog(params["w_hh_f"])                  # (4H, H)
    whhb = _reorder_gates_ifog(params["w_hh_b"])
    bf = _reorder_gates_ifog(params["b_f"].reshape(4 * H, 1)).reshape(4, H)
    bb = _reorder_gates_ifog(params["b_b"].reshape(4 * H, 1)).reshape(4, H)

    # Input-projection weight for the PAIRED input [x[s] | x[T-1-s]]:
    #   rows [:E]  -> forward gate columns,   rows [E:] -> backward gate columns.
    # Columns interleave directions inside each gate block: [i_f i_b | f_f f_b | o_f o_b | g_f g_b].
    z_e = jnp.zeros((E, 4, H), jnp.float32)
    wf_t = wihf.T.reshape(E, 4, H)
    wb_t = wihb.T.reshape(E, 4, H)
    wx = jnp.concatenate(
        [jnp.stack([wf_t, z_e], axis=2).reshape(E, 8 * H),
         jnp.stack([z_e, wb_t], axis=2).reshape(E, 8 * H)], axis=0)   # (2E, 8H)

    bx = jnp.stack([bf, bb], axis=1).reshape(1, 8 * H)                # (1, 8H)

    # Block-diagonal recurrent weight: rows [:H] act on h_f, rows [H:] on h_b.
    z_h = jnp.zeros((H, 4, H), jnp.float32)
    whf_t = whhf.T.reshape(H, 4, H)
    whb_t = whhb.T.reshape(H, 4, H)
    w_rec = jnp.concatenate(
        [jnp.stack([whf_t, z_h], axis=2).reshape(H, 8 * H),
         jnp.stack([z_h, whb_t], axis=2).reshape(H, 8 * H)], axis=0)  # (2H, 8H)

    # Block-diagonal classifier: cols 0:2 <- h_f, cols 2:4 <- h_b (time-reversed in storage).
    wcf = params["w_cls"][:, :H].T                                    # (H, 2)
    wcb = params["w_cls"][:, H:].T                                    # (H, 2)
    z2 = jnp.zeros((H, 2), jnp.float32)
    wc = jnp.concatenate([jnp.concatenate([wcf, z2], axis=1),
                          jnp.concatenate([z2, wcb], axis=1)], axis=0)  # (2H, 4)
    bc4 = jnp.concatenate([params["b_cls"],
                           jnp.zeros((1, 2), jnp.float32)], axis=1)     # (1, 4)

    return (wx.astype(mxu_dtype), bx, w_rec.astype(mxu_dtype),
            wc.astype(mxu_dtype), bc4)


def split_word_forward(batch_ids, params, *, batch_block_max=128, t_chunk_max=64,
                       unroll_max=8, mxu_dtype=jnp.float32):
    """batch_ids: (B, T) int32 token ids -> logits (B, T, 2) float32."""
    H = params["w_hh_f"].shape[1]
    E = params["w_ih_f"].shape[1]
    wx, bx, w_rec, wc, bc4 = prepare_kernel_weights(params, mxu_dtype)

    B, T = batch_ids.shape
    isz = jnp.dtype(mxu_dtype).itemsize
    sub = (8 * 4) // isz                      # sublane packing: 8 (f32) / 16 (bf16)

    # Time-major embedding gather (no separate transpose pass), then pre-align the
    # forward/backward lockstep inputs: x_pair[s] = [x[s] | x[T-1-s]].
    x_tm = jnp.take(params["embedding"], batch_ids.T, axis=0).astype(jnp.float32)  # (T, B, E)
    x_pair = jnp.concatenate([x_tm, x_tm[::-1]], axis=-1).astype(mxu_dtype)        # (T, B, 2E)

    # Big batch tile: one (or two, for v7x's 2 TCs) grid step(s) instead of many
    # 8-row blocks each repaying the serial T-step chain.
    Bsub = _round_up(B, sub)
    TB = min(batch_block_max, Bsub)
    TB = max(sub, (TB // sub) * sub)
    Bp = _round_up(Bsub, TB)
    nb = Bp // TB
    if Bp != B:
        x_pair = jnp.pad(x_pair, ((0, 0), (0, Bp - B), (0, 0)))

    t_chunk = _largest_divisor_leq(T, t_chunk_max)
    unroll = _largest_divisor_leq(T, unroll_max)

    # Explicit VMEM budget (mandatory headroom-awareness for v7x's 64 MiB).
    gx_bytes = T * TB * 8 * H * isz
    hist_bytes = T * TB * 2 * H * isz
    x_bytes = 2 * T * TB * 2 * E * isz
    out_bytes = 2 * T * TB * 4 * 4
    w_bytes = (2 * E * 8 * H + 2 * H * 8 * H + 2 * H * 4) * isz * 2 + 8 * H * 4 * 2
    vmem_limit = int(1.3 * (gx_bytes + hist_bytes + x_bytes + out_bytes + w_bytes)) + (2 << 20)
    vmem_limit = min(max(vmem_limit, 4 << 20), 100 << 20)
    # TODO(synk): for production-size T, stream gx / hist in T-chunks over an
    # 'arbitrary' grid axis (or pltpu.emit_pipeline) instead of keeping them
    # fully resident, to stay inside v7x's 64 MiB VMEM.

    kernel = functools.partial(_bilstm_cls_kernel, t_chunk=t_chunk, unroll=unroll)

    out4 = pl.pallas_call(
        kernel,
        out_shape=jax.ShapeDtypeStruct((T, Bp, 4), jnp.float32),
        grid=(nb,),
        in_specs=[
            pl.BlockSpec((T, TB, 2 * E), lambda b: (0, b, 0)),
            pl.BlockSpec((2 * E, 8 * H), lambda b: (0, 0)),
            pl.BlockSpec((1, 8 * H), lambda b: (0, 0)),
            pl.BlockSpec((2 * H, 8 * H), lambda b: (0, 0)),
            pl.BlockSpec((2 * H, 4), lambda b: (0, 0)),
            pl.BlockSpec((1, 4), lambda b: (0, 0)),
        ],
        out_specs=pl.BlockSpec((T, TB, 4), lambda b: (0, b, 0)),
        scratch_shapes=[
            pltpu.VMEM((T, TB, 8 * H), mxu_dtype),     # pre-aligned gate pre-activations
            pltpu.VMEM((T, TB, 2 * H), mxu_dtype),     # hidden-state history [fwd | bwd(rev)]
        ],
        compiler_params=pltpu.CompilerParams(
            dimension_semantics=("parallel",),
            vmem_limit_bytes=vmem_limit),
    )(x_pair, wx, bx, w_rec, wc, bc4)

    # Backward logits were produced in reversed time order; merge in XLA (tiny).
    out_tm = out4[:, :, :2] + out4[::-1, :, 2:]                       # (T, Bp, 2)
    return jnp.transpose(out_tm, (1, 0, 2))[:B]                       # (B, T, 2)


def init_params(key, vocab_size, embed_dim, hidden_dim):
    ks = jax.random.split(key, 9)
    s = 1.0 / float(hidden_dim) ** 0.5
    sc = 1.0 / float(2 * hidden_dim) ** 0.5

    def u(k, shape, scale):
        return jax.random.uniform(k, shape, jnp.float32, -scale, scale)

    return {
        "embedding": jax.random.normal(ks[0], (vocab_size, embed_dim), jnp.float32),
        # LSTM params (PyTorch shapes, gate rows i,f,g,o); b_* = fused bias_ih + bias_hh
        "w_ih_f": u(ks[1], (4 * hidden_dim, embed_dim), s),
        "w_hh_f": u(ks[2], (4 * hidden_dim, hidden_dim), s),
        "b_f":    u(ks[3], (1, 4 * hidden_dim), s),
        "w_ih_b": u(ks[4], (4 * hidden_dim, embed_dim), s),
        "w_hh_b": u(ks[5], (4 * hidden_dim, hidden_dim), s),
        "b_b":    u(ks[6], (1, 4 * hidden_dim), s),
        # classifier: Linear(2*hidden_dim, 2)
        "w_cls":  u(ks[7], (2, 2 * hidden_dim), sc),
        "b_cls":  u(ks[8], (1, 2), sc),
    }


def ref_forward(batch_ids, params):
    """Pure-JAX reference (matches PyTorch bidirectional LSTM semantics)."""
    x = jnp.take(params["embedding"], batch_ids, axis=0)             # (B, T, E)
    H = params["w_hh_f"].shape[1]
    B = x.shape[0]
    xt = jnp.transpose(x, (1, 0, 2))                                  # (T, B, E)

    def make_step(wih, whh, b):
        def step(carry, x_t):
            h, c = carry
            g = x_t @ wih.T + h @ whh.T + b[0]
            i = jax.nn.sigmoid(g[:, :H])
            f = jax.nn.sigmoid(g[:, H:2 * H])
            gg = jnp.tanh(g[:, 2 * H:3 * H])
            o = jax.nn.sigmoid(g[:, 3 * H:])
            c = f * c + i * gg
            h = o * jnp.tanh(c)
            return (h, c), h
        return step

    h0 = jnp.zeros((B, H), jnp.float32)
    c0 = jnp.zeros((B, H), jnp.float32)
    _, hf = lax.scan(make_step(params["w_ih_f"], params["w_hh_f"], params["b_f"]),
                     (h0, c0), xt)
    _, hb = lax.scan(make_step(params["w_ih_b"], params["w_hh_b"], params["b_b"]),
                     (h0, c0), xt[::-1])
    hb = hb[::-1]
    out = jnp.concatenate([hf, hb], axis=-1) @ params["w_cls"].T + params["b_cls"][0]
    return jnp.transpose(out, (1, 0, 2))                              # (B, T, 2)


if __name__ == "__main__":
    vocab_size, embed_dim, hidden_dim = 50, 16, 32
    B, T = 2, 8

    key = jax.random.PRNGKey(0)
    kp, kx = jax.random.split(key)
    params = init_params(kp, vocab_size, embed_dim, hidden_dim)
    batch_ids = jax.random.randint(kx, (B, T), 0, vocab_size, dtype=jnp.int32)

    ref = ref_forward(batch_ids, params)

    # f32 MXU path (tight check against the pure-JAX reference).
    fwd_f32 = jax.jit(functools.partial(split_word_forward, mxu_dtype=jnp.float32))
    out_f32 = jax.block_until_ready(fwd_f32(batch_ids, params))
    assert out_f32.shape == (B, T, 2), out_f32.shape
    assert jnp.allclose(out_f32, ref, atol=5e-4, rtol=5e-4), \
        float(jnp.max(jnp.abs(out_f32 - ref)))

    # bf16 MXU path (f32 cell state / gate sums / nonlinearities; looser tolerance).
    fwd_bf16 = jax.jit(functools.partial(split_word_forward, mxu_dtype=jnp.bfloat16))
    out_bf16 = jax.block_until_ready(fwd_bf16(batch_ids, params))
    assert out_bf16.shape == (B, T, 2), out_bf16.shape
    assert jnp.allclose(out_bf16, ref, atol=5e-2, rtol=5e-2), \
        float(jnp.max(jnp.abs(out_bf16 - ref)))

    print("KERNEL_OK")
</pallas_src>

<mosaic_0001>
module attributes {stable_mosaic.version = 11 : i64} {
  func.func @_bilstm_cls_kernel(%arg0: i32, %arg1: memref<8x8x32xf32, #tpu.memory_space<vmem>>, %arg2: memref<32x256xf32, #tpu.memory_space<vmem>>, %arg3: memref<1x256xf32, #tpu.memory_space<vmem>>, %arg4: memref<64x256xf32, #tpu.memory_space<vmem>>, %arg5: memref<64x4xf32, #tpu.memory_space<vmem>>, %arg6: memref<1x4xf32, #tpu.memory_space<vmem>>, %arg7: memref<8x8x4xf32, #tpu.memory_space<vmem>>, %arg8: memref<8x8x256xf32, #tpu.memory_space<vmem>>, %arg9: memref<8x8x64xf32, #tpu.memory_space<vmem>>) attributes {dimension_semantics = [#tpu.dimension_semantics<parallel>], iteration_bounds = array<i64: 1>, scalar_prefetch = 0 : i64, scratch_operands = 2 : i64, tpu.core_type = #tpu.core_type<tc>, window_params = [{transform_indices = @transform_0, window_bounds = array<i64: 8, 8, 32>}, {pipeline_mode = #tpu.pipeline_mode<synchronous>, transform_indices = @transform_1, window_bounds = array<i64: 32, 256>}, {pipeline_mode = #tpu.pipeline_mode<synchronous>, transform_indices = @transform_2, window_bounds = array<i64: 1, 256>}, {pipeline_mode = #tpu.pipeline_mode<synchronous>, transform_indices = @transform_3, window_bounds = array<i64: 64, 256>}, {pipeline_mode = #tpu.pipeline_mode<synchronous>, transform_indices = @transform_4, window_bounds = array<i64: 64, 4>}, {pipeline_mode = #tpu.pipeline_mode<synchronous>, transform_indices = @transform_5, window_bounds = array<i64: 1, 4>}, {transform_indices = @transform_6, window_bounds = array<i64: 8, 8, 4>}]} {
    %c0 = arith.constant 0 : index
    %c0_0 = arith.constant 0 : index
    %0 = vector.load %arg2[%c0, %c0_0] : memref<32x256xf32, #tpu.memory_space<vmem>>, vector<32x256xf32>
    %c0_1 = arith.constant 0 : index
    %c0_2 = arith.constant 0 : index
    %1 = vector.load %arg3[%c0_1, %c0_2] : memref<1x256xf32, #tpu.memory_space<vmem>>, vector<1x256xf32>
    %c0_i32 = arith.constant 0 : i32
    %c8_i32 = arith.constant 8 : i32
    %2 = arith.muli %c0_i32, %c8_i32 : i32
    %3 = tpu.assume_multiple %2, 8 : i32
    %4 = arith.index_cast %3 : i32 to index
    %c0_3 = arith.constant 0 : index
    %c0_4 = arith.constant 0 : index
    %5 = vector.load %arg1[%4, %c0_3, %c0_4] : memref<8x8x32xf32, #tpu.memory_space<vmem>>, vector<8x8x32xf32>
    %6 = vector.shape_cast %5 : vector<8x8x32xf32> to vector<64x32xf32>
    %cst = arith.constant dense<0.000000e+00> : vector<64x256xf32>
    %7 = tpu.matmul %6, %0, %cst {dimension_numbers = #tpu.dot_dimension_numbers<[1], [0], [0], [1], [0, 0, 1, 1], [], []>} : vector<64x32xf32>, vector<32x256xf32>, vector<64x256xf32> -> vector<64x256xf32>
    %8 = vector.broadcast %1 : vector<1x256xf32> to vector<64x256xf32>
    %9 = arith.addf %7, %8 : vector<64x256xf32>
    %10 = vector.shape_cast %9 : vector<64x256xf32> to vector<8x8x256xf32>
    %11 = arith.index_cast %3 : i32 to index
    %c0_5 = arith.constant 0 : index
    %c0_6 = arith.constant 0 : index
    %12 = vector.load %arg8[%11, %c0_5, %c0_6] : memref<8x8x256xf32, #tpu.memory_space<vmem>>, vector<8x8x256xf32>
    tpu.vector_store %arg8[%11, %c0_5, %c0_6], %10 {strides = array<i32>} : memref<8x8x256xf32, #tpu.memory_space<vmem>>, vector<8x8x256xf32>,
    %c1_i32 = arith.constant 1 : i32
    %c0_7 = arith.constant 0 : index
    %c0_8 = arith.constant 0 : index
    %13 = vector.load %arg4[%c0_7, %c0_8] : memref<64x256xf32, #tpu.memory_space<vmem>>, vector<64x256xf32>
    %cst_9 = arith.constant 0.000000e+00 : f32
    %14 = vector.broadcast %cst_9 : f32 to vector<8x64xf32>
    %cst_10 = arith.constant 0.000000e+00 : f32
    %15 = vector.broadcast %cst_10 : f32 to vector<8x64xf32>
    %c0_i32_11 = arith.constant 0 : i32
    %cst_12 = arith.constant dense<0.000000e+00> : vector<8x256xf32>
    %16 = tpu.matmul %14, %13, %cst_12 {dimension_numbers = #tpu.dot_dimension_numbers<[1], [0], [0], [1], [0, 0, 1, 1], [], []>} : vector<8x64xf32>, vector<64x256xf32>, vector<8x256xf32> -> vector<8x256xf32>
    %17 = arith.index_cast %c0_i32_11 : i32 to index
    %c0_13 = arith.constant 0 : index
    %c0_14 = arith.constant 0 : index
    %18 = vector.load %arg8[%17, %c0_13, %c0_14] : memref<8x8x256xf32, #tpu.memory_space<vmem>>, vector<1x8x256xf32>
    %19 = vector.shape_cast %18 : vector<1x8x256xf32> to vector<8x256xf32>
    %20 = arith.addf %16, %19 : vector<8x256xf32>
    %21 = vector.extract_strided_slice %20 {offsets = [0, 0], sizes = [8, 192], strides = [1, 1]} : vector<8x256xf32> to vector<8x192xf32>
    %22 = arith.negf %21 : vector<8x192xf32>
    %23 = math.exp %22 : vector<8x192xf32>
    %cst_15 = arith.constant 1.000000e+00 : f32
    %24 = vector.broadcast %cst_15 : f32 to vector<8x192xf32>
    %25 = arith.addf %24, %23 : vector<8x192xf32>
    %26 = arith.divf %24, %25 : vector<8x192xf32>
    %27 = vector.extract_strided_slice %20 {offsets = [0, 192], sizes = [8, 64], strides = [1, 1]} : vector<8x256xf32> to vector<8x64xf32>
    %28 = math.tanh %27 : vector<8x64xf32>
    %29 = vector.extract_strided_slice %26 {offsets = [0, 0], sizes = [8, 64], strides = [1, 1]} : vector<8x192xf32> to vector<8x64xf32>
    %30 = vector.extract_strided_slice %26 {offsets = [0, 64], sizes = [8, 64], strides = [1, 1]} : vector<8x192xf32> to vector<8x64xf32>
    %31 = vector.extract_strided_slice %26 {offsets = [0, 128], sizes = [8, 64], strides = [1, 1]} : vector<8x192xf32> to vector<8x64xf32>
    %32 = arith.mulf %30, %15 : vector<8x64xf32>
    %33 = arith.mulf %29, %28 : vector<8x64xf32>
    %34 = arith.addf %32, %33 : vector<8x64xf32>
    %35 = math.tanh %34 : vector<8x64xf32>
    %36 = arith.mulf %31, %35 : vector<8x64xf32>
    %37 = arith.index_cast %c0_i32_11 : i32 to index
    %c0_16 = arith.constant 0 : index
    %c0_17 = arith.constant 0 : index
    %38 = vector.load %arg9[%37, %c0_16, %c0_17] : memref<8x8x64xf32, #tpu.memory_space<vmem>>, vector<1x8x64xf32>
    %39 = vector.shape_cast %38 : vector<1x8x64xf32> to vector<8x64xf32>
    %40 = vector.shape_cast %36 : vector<8x64xf32> to vector<1x8x64xf32>
    tpu.vector_store %arg9[%37, %c0_16, %c0_17], %40 {strides = array<i32>} : memref<8x8x64xf32, #tpu.memory_space<vmem>>, vector<1x8x64xf32>,
    %c1_i32_18 = arith.constant 1 : i32
    %cst_19 = arith.constant dense<0.000000e+00> : vector<8x256xf32>
    %41 = tpu.matmul %36, %13, %cst_19 {dimension_numbers = #tpu.dot_dimension_numbers<[1], [0], [0], [1], [0, 0, 1, 1], [], []>} : vector<8x64xf32>, vector<64x256xf32>, vector<8x256xf32> -> vector<8x256xf32>
    %42 = arith.index_cast %c1_i32_18 : i32 to index
    %c0_20 = arith.constant 0 : index
    %c0_21 = arith.constant 0 : index
    %43 = vector.load %arg8[%42, %c0_20, %c0_21] : memref<8x8x256xf32, #tpu.memory_space<vmem>>, vector<1x8x256xf32>
    %44 = vector.shape_cast %43 : vector<1x8x256xf32> to vector<8x256xf32>
    %45 = arith.addf %41, %44 : vector<8x256xf32>
    %46 = vector.extract_strided_slice %45 {offsets = [0, 0], sizes = [8, 192], strides = [1, 1]} : vector<8x256xf32> to vector<8x192xf32>
    %47 = arith.negf %46 : vector<8x192xf32>
    %48 = math.exp %47 : vector<8x192xf32>
    %cst_22 = arith.constant 1.000000e+00 : f32
    %49 = vector.broadcast %cst_22 : f32 to vector<8x192xf32>
    %50 = arith.addf %49, %48 : vector<8x192xf32>
    %51 = arith.divf %49, %50 : vector<8x192xf32>
    %52 = vector.extract_strided_slice %45 {offsets = [0, 192], sizes = [8, 64], strides = [1, 1]} : vector<8x256xf32> to vector<8x64xf32>
    %53 = math.tanh %52 : vector<8x64xf32>
    %54 = vector.extract_strided_slice %51 {offsets = [0, 0], sizes = [8, 64], strides = [1, 1]} : vector<8x192xf32> to vector<8x64xf32>
    %55 = vector.extract_strided_slice %51 {offsets = [0, 64], sizes = [8, 64], strides = [1, 1]} : vector<8x192xf32> to vector<8x64xf32>
    %56 = vector.extract_strided_slice %51 {offsets = [0, 128], sizes = [8, 64], strides = [1, 1]} : vector<8x192xf32> to vector<8x64xf32>
    %57 = arith.mulf %55, %34 : vector<8x64xf32>
    %58 = arith.mulf %54, %53 : vector<8x64xf32>
    %59 = arith.addf %57, %58 : vector<8x64xf32>
    %60 = math.tanh %59 : vector<8x64xf32>
    %61 = arith.mulf %56, %60 : vector<8x64xf32>
    %62 = arith.index_cast %c1_i32_18 : i32 to index
    %c0_23 = arith.constant 0 : index
    %c0_24 = arith.constant 0 : index
    %63 = vector.load %arg9[%62, %c0_23, %c0_24] : memref<8x8x64xf32, #tpu.memory_space<vmem>>, vector<1x8x64xf32>
    %64 = vector.shape_cast %63 : vector<1x8x64xf32> to vector<8x64xf32>
    %65 = vector.shape_cast %61 : vector<8x64xf32> to vector<1x8x64xf32>
    tpu.vector_store %arg9[%62, %c0_23, %c0_24], %65 {strides = array<i32>} : memref<8x8x64xf32, #tpu.memory_space<vmem>>, vector<1x8x64xf32>,
    %c2_i32 = arith.constant 2 : i32
    %cst_25 = arith.constant dense<0.000000e+00> : vector<8x256xf32>
    %66 = tpu.matmul %61, %13, %cst_25 {dimension_numbers = #tpu.dot_dimension_numbers<[1], [0], [0], [1], [0, 0, 1, 1], [], []>} : vector<8x64xf32>, vector<64x256xf32>, vector<8x256xf32> -> vector<8x256xf32>
    %67 = arith.index_cast %c2_i32 : i32 to index
    %c0_26 = arith.constant 0 : index
    %c0_27 = arith.constant 0 : index
    %68 = vector.load %arg8[%67, %c0_26, %c0_27] : memref<8x8x256xf32, #tpu.memory_space<vmem>>, vector<1x8x256xf32>
    %69 = vector.shape_cast %68 : vector<1x8x256xf32> to vector<8x256xf32>
    %70 = arith.addf %66, %69 : vector<8x256xf32>
    %71 = vector.extract_strided_slice %70 {offsets = [0, 0], sizes = [8, 192], strides = [1, 1]} : vector<8x256xf32> to vector<8x192xf32>
    %72 = arith.negf %71 : vector<8x192xf32>
    %73 = math.exp %72 : vector<8x192xf32>
    %cst_28 = arith.constant 1.000000e+00 : f32
    %74 = vector.broadcast %cst_28 : f32 to vector<8x192xf32>
    %75 = arith.addf %74, %73 : vector<8x192xf32>
    %76 = arith.divf %74, %75 : vector<8x192xf32>
    %77 = vector.extract_strided_slice %70 {offsets = [0, 192], sizes = [8, 64], strides = [1, 1]} : vector<8x256xf32> to vector<8x64xf32>
    %78 = math.tanh %77 : vector<8x64xf32>
    %79 = vector.extract_strided_slice %76 {offsets = [0, 0], sizes = [8, 64], strides = [1, 1]} : vector<8x192xf32> to vector<8x64xf32>
    %80 = vector.extract_strided_slice %76 {offsets = [0, 64], sizes = [8, 64], strides = [1, 1]} : vector<8x192xf32> to vector<8x64xf32>
    %81 = vector.extract_strided_slice %76 {offsets = [0, 128], sizes = [8, 64], strides = [1, 1]} : vector<8x192xf32> to vector<8x64xf32>
    %82 = arith.mulf %80, %59 : vector<8x64xf32>
    %83 = arith.mulf %79, %78 : vector<8x64xf32>
    %84 = arith.addf %82, %83 : vector<8x64xf32>
    %85 = math.tanh %84 : vector<8x64xf32>
    %86 = arith.mulf %81, %85 : vector<8x64xf32>
    %87 = arith.index_cast %c2_i32 : i32 to index
    %c0_29 = arith.constant 0 : index
    %c0_30 = arith.constant 0 : index
    %88 = vector.load %arg9[%87, %c0_29, %c0_30] : memref<8x8x64xf32, #tpu.memory_space<vmem>>, vector<1x8x64xf32>
    %89 = vector.shape_cast %88 : vector<1x8x64xf32> to vector<8x64xf32>
    %90 = vector.shape_cast %86 : vector<8x64xf32> to vector<1x8x64xf32>
    tpu.vector_store %arg9[%87, %c0_29, %c0_30], %90 {strides = array<i32>} : memref<8x8x64xf32, #tpu.memory_space<vmem>>, vector<1x8x64xf32>,
    %c3_i32 = arith.constant 3 : i32
    %cst_31 = arith.constant dense<0.000000e+00> : vector<8x256xf32>
    %91 = tpu.matmul %86, %13, %cst_31 {dimension_numbers = #tpu.dot_dimension_numbers<[1], [0], [0], [1], [0, 0, 1, 1], [], []>} : vector<8x64xf32>, vector<64x256xf32>, vector<8x256xf32> -> vector<8x256xf32>
    %92 = arith.index_cast %c3_i32 : i32 to index
    %c0_32 = arith.constant 0 : index
    %c0_33 = arith.constant 0 : index
    %93 = vector.load %arg8[%92, %c0_32, %c0_33] : memref<8x8x256xf32, #tpu.memory_space<vmem>>, vector<1x8x256xf32>
    %94 = vector.shape_cast %93 : vector<1x8x256xf32> to vector<8x256xf32>
    %95 = arith.addf %91, %94 : vector<8x256xf32>
    %96 = vector.extract_strided_slice %95 {offsets = [0, 0], sizes = [8, 192], strides = [1, 1]} : vector<8x256xf32> to vector<8x192xf32>
    %97 = arith.negf %96 : vector<8x192xf32>
    %98 = math.exp %97 : vector<8x192xf32>
    %cst_34 = arith.constant 1.000000e+00 : f32
    %99 = vector.broadcast %cst_34 : f32 to vector<8x192xf32>
    %100 = arith.addf %99, %98 : vector<8x192xf32>
    %101 = arith.divf %99, %100 : vector<8x192xf32>
    %102 = vector.extract_strided_slice %95 {offsets = [0, 192], sizes = [8, 64], strides = [1, 1]} : vector<8x256xf32> to vector<8x64xf32>
    %103 = math.tanh %102 : vector<8x64xf32>
    %104 = vector.extract_strided_slice %101 {offsets = [0, 0], sizes = [8, 64], strides = [1, 1]} : vector<8x192xf32> to vector<8x64xf32>
    %105 = vector.extract_strided_slice %101 {offsets = [0, 64], sizes = [8, 64], strides = [1, 1]} : vector<8x192xf32> to vector<8x64xf32>
    %106 = vector.extract_strided_slice %101 {offsets = [0, 128], sizes = [8, 64], strides = [1, 1]} : vector<8x192xf32> to vector<8x64xf32>
    %107 = arith.mulf %105, %84 : vector<8x64xf32>
    %108 = arith.mulf %104, %103 : vector<8x64xf32>
    %109 = arith.addf %107, %108 : vector<8x64xf32>
    %110 = math.tanh %109 : vector<8x64xf32>
    %111 = arith.mulf %106, %110 : vector<8x64xf32>
    %112 = arith.index_cast %c3_i32 : i32 to index
    %c0_35 = arith.constant 0 : index
    %c0_36 = arith.constant 0 : index
    %113 = vector.load %arg9[%112, %c0_35, %c0_36] : memref<8x8x64xf32, #tpu.memory_space<vmem>>, vector<1x8x64xf32>
    %114 = vector.shape_cast %113 : vector<1x8x64xf32> to vector<8x64xf32>
    %115 = vector.shape_cast %111 : vector<8x64xf32> to vector<1x8x64xf32>
    tpu.vector_store %arg9[%112, %c0_35, %c0_36], %115 {strides = array<i32>} : memref<8x8x64xf32, #tpu.memory_space<vmem>>, vector<1x8x64xf32>,
    %c4_i32 = arith.constant 4 : i32
    %cst_37 = arith.constant dense<0.000000e+00> : vector<8x256xf32>
    %116 = tpu.matmul %111, %13, %cst_37 {dimension_numbers = #tpu.dot_dimension_numbers<[1], [0], [0], [1], [0, 0, 1, 1], [], []>} : vector<8x64xf32>, vector<64x256xf32>, vector<8x256xf32> -> vector<8x256xf32>
    %117 = arith.index_cast %c4_i32 : i32 to index
    %c0_38 = arith.constant 0 : index
    %c0_39 = arith.constant 0 : index
    %118 = vector.load %arg8[%117, %c0_38, %c0_39] : memref<8x8x256xf32, #tpu.memory_space<vmem>>, vector<1x8x256xf32>
    %119 = vector.shape_cast %118 : vector<1x8x256xf32> to vector<8x256xf32>
    %120 = arith.addf %116, %119 : vector<8x256xf32>
    %121 = vector.extract_strided_slice %120 {offsets = [0, 0], sizes = [8, 192], strides = [1, 1]} : vector<8x256xf32> to vector<8x192xf32>
    %122 = arith.negf %121 : vector<8x192xf32>
    %123 = math.exp %122 : vector<8x192xf32>
    %cst_40 = arith.constant 1.000000e+00 : f32
    %124 = vector.broadcast %cst_40 : f32 to vector<8x192xf32>
    %125 = arith.addf %124, %123 : vector<8x192xf32>
    %126 = arith.divf %124, %125 : vector<8x192xf32>
    %127 = vector.extract_strided_slice %120 {offsets = [0, 192], sizes = [8, 64], strides = [1, 1]} : vector<8x256xf32> to vector<8x64xf32>
    %128 = math.tanh %127 : vector<8x64xf32>
    %129 = vector.extract_strided_slice %126 {offsets = [0, 0], sizes = [8, 64], strides = [1, 1]} : vector<8x192xf32> to vector<8x64xf32>
    %130 = vector.extract_strided_slice %126 {offsets = [0, 64], sizes = [8, 64], strides = [1, 1]} : vector<8x192xf32> to vector<8x64xf32>
    %131 = vector.extract_strided_slice %126 {offsets = [0, 128], sizes = [8, 64], strides = [1, 1]} : vector<8x192xf32> to vector<8x64xf32>
    %132 = arith.mulf %130, %109 : vector<8x64xf32>
    %133 = arith.mulf %129, %128 : vector<8x64xf32>
    %134 = arith.addf %132, %133 : vector<8x64xf32>
    %135 = math.tanh %134 : vector<8x64xf32>
    %136 = arith.mulf %131, %135 : vector<8x64xf32>
    %137 = arith.index_cast %c4_i32 : i32 to index
    %c0_41 = arith.constant 0 : index
    %c0_42 = arith.constant 0 : index
    %138 = vector.load %arg9[%137, %c0_41, %c0_42] : memref<8x8x64xf32, #tpu.memory_space<vmem>>, vector<1x8x64xf32>
    %139 = vector.shape_cast %138 : vector<1x8x64xf32> to vector<8x64xf32>
    %140 = vector.shape_cast %136 : vector<8x64xf32> to vector<1x8x64xf32>
    tpu.vector_store %arg9[%137, %c0_41, %c0_42], %140 {strides = array<i32>} : memref<8x8x64xf32, #tpu.memory_space<vmem>>, vector<1x8x64xf32>,
    %c5_i32 = arith.constant 5 : i32
    %cst_43 = arith.constant dense<0.000000e+00> : vector<8x256xf32>
    %141 = tpu.matmul %136, %13, %cst_43 {dimension_numbers = #tpu.dot_dimension_numbers<[1], [0], [0], [1], [0, 0, 1, 1], [], []>} : vector<8x64xf32>, vector<64x256xf32>, vector<8x256xf32> -> vector<8x256xf32>
    %142 = arith.index_cast %c5_i32 : i32 to index
    %c0_44 = arith.constant 0 : index
    %c0_45 = arith.constant 0 : index
    %143 = vector.load %arg8[%142, %c0_44, %c0_45] : memref<8x8x256xf32, #tpu.memory_space<vmem>>, vector<1x8x256xf32>
    %144 = vector.shape_cast %143 : vector<1x8x256xf32> to vector<8x256xf32>
    %145 = arith.addf %141, %144 : vector<8x256xf32>
    %146 = vector.extract_strided_slice %145 {offsets = [0, 0], sizes = [8, 192], strides = [1, 1]} : vector<8x256xf32> to vector<8x192xf32>
    %147 = arith.negf %146 : vector<8x192xf32>
    %148 = math.exp %147 : vector<8x192xf32>
    %cst_46 = arith.constant 1.000000e+00 : f32
    %149 = vector.broadcast %cst_46 : f32 to vector<8x192xf32>
    %150 = arith.addf %149, %148 : vector<8x192xf32>
    %151 = arith.divf %149, %150 : vector<8x192xf32>
    %152 = vector.extract_strided_slice %145 {offsets = [0, 192], sizes = [8, 64], strides = [1, 1]} : vector<8x256xf32> to vector<8x64xf32>
    %153 = math.tanh %152 : vector<8x64xf32>
    %154 = vector.extract_strided_slice %151 {offsets = [0, 0], sizes = [8, 64], strides = [1, 1]} : vector<8x192xf32> to vector<8x64xf32>
    %155 = vector.extract_strided_slice %151 {offsets = [0, 64], sizes = [8, 64], strides = [1, 1]} : vector<8x192xf32> to vector<8x64xf32>
    %156 = vector.extract_strided_slice %151 {offsets = [0, 128], sizes = [8, 64], strides = [1, 1]} : vector<8x192xf32> to vector<8x64xf32>
    %157 = arith.mulf %155, %134 : vector<8x64xf32>
    %158 = arith.mulf %154, %153 : vector<8x64xf32>
    %159 = arith.addf %157, %158 : vector<8x64xf32>
    %160 = math.tanh %159 : vector<8x64xf32>
    %161 = arith.mulf %156, %160 : vector<8x64xf32>
    %162 = arith.index_cast %c5_i32 : i32 to index
    %c0_47 = arith.constant 0 : index
    %c0_48 = arith.constant 0 : index
    %163 = vector.load %arg9[%162, %c0_47, %c0_48] : memref<8x8x64xf32, #tpu.memory_space<vmem>>, vector<1x8x64xf32>
    %164 = vector.shape_cast %163 : vector<1x8x64xf32> to vector<8x64xf32>
    %165 = vector.shape_cast %161 : vector<8x64xf32> to vector<1x8x64xf32>
    tpu.vector_store %arg9[%162, %c0_47, %c0_48], %165 {strides = array<i32>} : memref<8x8x64xf32, #tpu.memory_space<vmem>>, vector<1x8x64xf32>,
    %c6_i32 = arith.constant 6 : i32
    %cst_49 = arith.constant dense<0.000000e+00> : vector<8x256xf32>
    %166 = tpu.matmul %161, %13, %cst_49 {dimension_numbers = #tpu.dot_dimension_numbers<[1], [0], [0], [1], [0, 0, 1, 1], [], []>} : vector<8x64xf32>, vector<64x256xf32>, vector<8x256xf32> -> vector<8x256xf32>
    %167 = arith.index_cast %c6_i32 : i32 to index
    %c0_50 = arith.constant 0 : index
    %c0_51 = arith.constant 0 : index
    %168 = vector.load %arg8[%167, %c0_50, %c0_51] : memref<8x8x256xf32, #tpu.memory_space<vmem>>, vector<1x8x256xf32>
    %169 = vector.shape_cast %168 : vector<1x8x256xf32> to vector<8x256xf32>
    %170 = arith.addf %166, %169 : vector<8x256xf32>
    %171 = vector.extract_strided_slice %170 {offsets = [0, 0], sizes = [8, 192], strides = [1, 1]} : vector<8x256xf32> to vector<8x192xf32>
    %172 = arith.negf %171 : vector<8x192xf32>
    %173 = math.exp %172 : vector<8x192xf32>
    %cst_52 = arith.constant 1.000000e+00 : f32
    %174 = vector.broadcast %cst_52 : f32 to vector<8x192xf32>
    %175 = arith.addf %174, %173 : vector<8x192xf32>
    %176 = arith.divf %174, %175 : vector<8x192xf32>
    %177 = vector.extract_strided_slice %170 {offsets = [0, 192], sizes = [8, 64], strides = [1, 1]} : vector<8x256xf32> to vector<8x64xf32>
    %178 = math.tanh %177 : vector<8x64xf32>
    %179 = vector.extract_strided_slice %176 {offsets = [0, 0], sizes = [8, 64], strides = [1, 1]} : vector<8x192xf32> to vector<8x64xf32>
    %180 = vector.extract_strided_slice %176 {offsets = [0, 64], sizes = [8, 64], strides = [1, 1]} : vector<8x192xf32> to vector<8x64xf32>
    %181 = vector.extract_strided_slice %176 {offsets = [0, 128], sizes = [8, 64], strides = [1, 1]} : vector<8x192xf32> to vector<8x64xf32>
    %182 = arith.mulf %180, %159 : vector<8x64xf32>
    %183 = arith.mulf %179, %178 : vector<8x64xf32>
    %184 = arith.addf %182, %183 : vector<8x64xf32>
    %185 = math.tanh %184 : vector<8x64xf32>
    %186 = arith.mulf %181, %185 : vector<8x64xf32>
    %187 = arith.index_cast %c6_i32 : i32 to index
    %c0_53 = arith.constant 0 : index
    %c0_54 = arith.constant 0 : index
    %188 = vector.load %arg9[%187, %c0_53, %c0_54] : memref<8x8x64xf32, #tpu.memory_space<vmem>>, vector<1x8x64xf32>
    %189 = vector.shape_cast %188 : vector<1x8x64xf32> to vector<8x64xf32>
    %190 = vector.shape_cast %186 : vector<8x64xf32> to vector<1x8x64xf32>
    tpu.vector_store %arg9[%187, %c0_53, %c0_54], %190 {strides = array<i32>} : memref<8x8x64xf32, #tpu.memory_space<vmem>>, vector<1x8x64xf32>,
    %c7_i32 = arith.constant 7 : i32
    %cst_55 = arith.constant dense<0.000000e+00> : vector<8x256xf32>
    %191 = tpu.matmul %186, %13, %cst_55 {dimension_numbers = #tpu.dot_dimension_numbers<[1], [0], [0], [1], [0, 0, 1, 1], [], []>} : vector<8x64xf32>, vector<64x256xf32>, vector<8x256xf32> -> vector<8x256xf32>
    %192 = arith.index_cast %c7_i32 : i32 to index
    %c0_56 = arith.constant 0 : index
    %c0_57 = arith.constant 0 : index
    %193 = vector.load %arg8[%192, %c0_56, %c0_57] : memref<8x8x256xf32, #tpu.memory_space<vmem>>, vector<1x8x256xf32>
    %194 = vector.shape_cast %193 : vector<1x8x256xf32> to vector<8x256xf32>
    %195 = arith.addf %191, %194 : vector<8x256xf32>
    %196 = vector.extract_strided_slice %195 {offsets = [0, 0], sizes = [8, 192], strides = [1, 1]} : vector<8x256xf32> to vector<8x192xf32>
    %197 = arith.negf %196 : vector<8x192xf32>
    %198 = math.exp %197 : vector<8x192xf32>
    %cst_58 = arith.constant 1.000000e+00 : f32
    %199 = vector.broadcast %cst_58 : f32 to vector<8x192xf32>
    %200 = arith.addf %199, %198 : vector<8x192xf32>
    %201 = arith.divf %199, %200 : vector<8x192xf32>
    %202 = vector.extract_strided_slice %195 {offsets = [0, 192], sizes = [8, 64], strides = [1, 1]} : vector<8x256xf32> to vector<8x64xf32>
    %203 = math.tanh %202 : vector<8x64xf32>
    %204 = vector.extract_strided_slice %201 {offsets = [0, 0], sizes = [8, 64], strides = [1, 1]} : vector<8x192xf32> to vector<8x64xf32>
    %205 = vector.extract_strided_slice %201 {offsets = [0, 64], sizes = [8, 64], strides = [1, 1]} : vector<8x192xf32> to vector<8x64xf32>
    %206 = vector.extract_strided_slice %201 {offsets = [0, 128], sizes = [8, 64], strides = [1, 1]} : vector<8x192xf32> to vector<8x64xf32>
    %207 = arith.mulf %205, %184 : vector<8x64xf32>
    %208 = arith.mulf %204, %203 : vector<8x64xf32>
    %209 = arith.addf %207, %208 : vector<8x64xf32>
    %210 = math.tanh %209 : vector<8x64xf32>
    %211 = arith.mulf %206, %210 : vector<8x64xf32>
    %212 = arith.index_cast %c7_i32 : i32 to index
    %c0_59 = arith.constant 0 : index
    %c0_60 = arith.constant 0 : index
    %213 = vector.load %arg9[%212, %c0_59, %c0_60] : memref<8x8x64xf32, #tpu.memory_space<vmem>>, vector<1x8x64xf32>
    %214 = vector.shape_cast %213 : vector<1x8x64xf32> to vector<8x64xf32>
    %215 = vector.shape_cast %211 : vector<8x64xf32> to vector<1x8x64xf32>
    tpu.vector_store %arg9[%212, %c0_59, %c0_60], %215 {strides = array<i32>} : memref<8x8x64xf32, #tpu.memory_space<vmem>>, vector<1x8x64xf32>,
    %c8_i32_61 = arith.constant 8 : i32
    %c0_62 = arith.constant 0 : index
    %c0_63 = arith.constant 0 : index
    %216 = vector.load %arg5[%c0_62, %c0_63] : memref<64x4xf32, #tpu.memory_space<vmem>>, vector<64x4xf32>
    %c0_64 = arith.constant 0 : index
    %c0_65 = arith.constant 0 : index
    %217 = vector.load %arg6[%c0_64, %c0_65] : memref<1x4xf32, #tpu.memory_space<vmem>>, vector<1x4xf32>
    %c0_i32_66 = arith.constant 0 : i32
    %c8_i32_67 = arith.constant 8 : i32
    %218 = arith.muli %c0_i32_66, %c8_i32_67 : i32
    %219 = tpu.assume_multiple %218, 8 : i32
    %220 = arith.index_cast %219 : i32 to index
    %c0_68 = arith.constant 0 : index
    %c0_69 = arith.constant 0 : index
    %221 = vector.load %arg9[%220, %c0_68, %c0_69] : memref<8x8x64xf32, #tpu.memory_space<vmem>>, vector<8x8x64xf32>
    %222 = vector.shape_cast %221 : vector<8x8x64xf32> to vector<64x64xf32>
    %cst_70 = arith.constant dense<0.000000e+00> : vector<64x4xf32>
    %223 = tpu.matmul %222, %216, %cst_70 {dimension_numbers = #tpu.dot_dimension_numbers<[1], [0], [0], [1], [0, 0, 1, 1], [], []>} : vector<64x64xf32>, vector<64x4xf32>, vector<64x4xf32> -> vector<64x4xf32>
    %224 = vector.broadcast %217 : vector<1x4xf32> to vector<64x4xf32>
    %225 = arith.addf %223, %224 : vector<64x4xf32>
    %226 = vector.shape_cast %225 : vector<64x4xf32> to vector<8x8x4xf32>
    %227 = arith.index_cast %219 : i32 to index
    %c0_71 = arith.constant 0 : index
    %c0_72 = arith.constant 0 : index
    %228 = vector.load %arg7[%227, %c0_71, %c0_72] : memref<8x8x4xf32, #tpu.memory_space<vmem>>, vector<8x8x4xf32>
    tpu.vector_store %arg7[%227, %c0_71, %c0_72], %226 {strides = array<i32>} : memref<8x8x4xf32, #tpu.memory_space<vmem>>, vector<8x8x4xf32>,
    %c1_i32_73 = arith.constant 1 : i32
    return
  }
  func.func @transform_0(%arg0: i32) -> (i32, i32, i32) {
    %c0_i32 = arith.constant 0 : i32
    %c0_i32_0 = arith.constant 0 : i32
    %c0_i32_1 = arith.constant 0 : i32
    return %c0_i32, %arg0, %c0_i32_0 : i32, i32, i32
  }
  func.func @transform_1(%arg0: i32) -> (i32, i32) {
    %c0_i32 = arith.constant 0 : i32
    %c0_i32_0 = arith.constant 0 : i32
    %c0_i32_1 = arith.constant 0 : i32
    return %c0_i32, %c0_i32_0 : i32, i32
  }
  func.func @transform_2(%arg0: i32) -> (i32, i32) {
    %c0_i32 = arith.constant 0 : i32
    %c0_i32_0 = arith.constant 0 : i32
    %c0_i32_1 = arith.constant 0 : i32
    return %c0_i32, %c0_i32_0 : i32, i32
  }
  func.func @transform_3(%arg0: i32) -> (i32, i32) {
    %c0_i32 = arith.constant 0 : i32
    %c0_i32_0 = arith.constant 0 : i32
    %c0_i32_1 = arith.constant 0 : i32
    return %c0_i32, %c0_i32_0 : i32, i32
  }
  func.func @transform_4(%arg0: i32) -> (i32, i32) {
    %c0_i32 = arith.constant 0 : i32
    %c0_i32_0 = arith.constant 0 : i32
    %c0_i32_1 = arith.constant 0 : i32
    return %c0_i32, %c0_i32_0 : i32, i32
  }
  func.func @transform_5(%arg0: i32) -> (i32, i32) {
    %c0_i32 = arith.constant 0 : i32
    %c0_i32_0 = arith.constant 0 : i32
    %c0_i32_1 = arith.constant 0 : i32
    return %c0_i32, %c0_i32_0 : i32, i32
  }
  func.func @transform_6(%arg0: i32) -> (i32, i32, i32) {
    %c0_i32 = arith.constant 0 : i32
    %c0_i32_0 = arith.constant 0 : i32
    %c0_i32_1 = arith.constant 0 : i32
    return %c0_i32, %arg0, %c0_i32_0 : i32, i32, i32
  }
}

</mosaic_0001>

<llo_original>
// kernel: split_word_forward.1
$region0: #{split_word_forward.1}
  #allocation0 [shape = 'u32[]', space=smem, size = 0x4, offset = 0x4, fixed_abs, tag = 'smem constant byte address 0x4 - core index']
  #allocation1 [shape = 'u32[144,128]{1,0:T(1,128)}', space=vmem, size = 0x12000, scoped, tag = 'internal scratch']
  #allocation2 [shape = 'f32[8,8,256]{2,1,0:T(8,128)}', space=vmem, size = 0x10000, scoped, tag = 'scratch operand']
  #allocation3 [shape = 'f32[8,8,64]{2,1,0:T(8,128)}', space=vmem, size = 0x8000, scoped, tag = 'scratch operand']
  %s0 = inlined_call_operand.vmem [shape: f32[8,8,32], index: 0, kind: input, shape index: {}]
  %s1 = inlined_call_operand.vmem [shape: f32[32,256], index: 1, kind: input, shape index: {}]
  %s2 = inlined_call_operand.vmem [shape: f32[1,256], index: 2, kind: input, shape index: {}]
  %s3 = inlined_call_operand.vmem [shape: f32[64,256], index: 3, kind: input, shape index: {}]
  %s4 = inlined_call_operand.vmem [shape: f32[64,4], index: 4, kind: input, shape index: {}]
  %s5 = inlined_call_operand.vmem [shape: f32[1,4], index: 5, kind: input, shape index: {}]
  %s6 = inlined_call_operand.vmem [shape: f32[8,8,4], index: 6, kind: output, shape index: {}]
  %s7 = sld [smem:[#allocation0]]
  $region34: #{split_word_forward.1} parent=0
    _
  %s9 = ssub.s32 1, %s7
  %s10 = scalar_select 0, %s9, %s7
  // Predicated region
  $region2: #{split_word_forward.1} parent=0 // pred_check
    _
  $region3: #{split_word_forward.1} parent=0 // pred_check_branch
    %12 = sbr.rel (0) target = $region5
  $region4: #{split_word_forward.1} parent=0 // pred_region
    _
  $region5: #{split_word_forward.1} parent=0 // pred_fallthru
    _
  // Predicated region
  $region6: #{split_word_forward.1} parent=0 // pred_check
    _
  $region7: #{split_word_forward.1} parent=0 // pred_check_branch
    %14 = sbr.rel (0) target = $region9
  $region8: #{split_word_forward.1} parent=0 // pred_region
    _
  $region9: #{split_word_forward.1} parent=0 // pred_fallthru
    _
  // Predicated region
  $region10: #{split_word_forward.1} parent=0 // pred_check
    _
  $region11: #{split_word_forward.1} parent=0 // pred_check_branch
    %16 = sbr.rel (0) target = $region13
  $region12: #{split_word_forward.1} parent=0 // pred_region
    _
  $region13: #{split_word_forward.1} parent=0 // pred_fallthru
    _
  // Predicated region
  $region14: #{split_word_forward.1} parent=0 // pred_check
    _
  $region15: #{split_word_forward.1} parent=0 // pred_check_branch
    %18 = sbr.rel (0) target = $region17
  $region16: #{split_word_forward.1} parent=0 // pred_region
    _
  $region17: #{split_word_forward.1} parent=0 // pred_fallthru
    _
  // Predicated region
  $region18: #{split_word_forward.1} parent=0 // pred_check
    _
  $region19: #{split_word_forward.1} parent=0 // pred_check_branch
    %20 = sbr.rel (0) target = $region21
  $region20: #{split_word_forward.1} parent=0 // pred_region
    _
  $region21: #{split_word_forward.1} parent=0 // pred_fallthru
    _
  // Predicated region
  $region22: #{split_word_forward.1} parent=0 // pred_check
    _
  $region23: #{split_word_forward.1} parent=0 // pred_check_branch
    %22 = sbr.rel (0) target = $region25
  $region24: #{split_word_forward.1} parent=0 // pred_region
    _
  $region25: #{split_word_forward.1} parent=0 // pred_fallthru
    _
  %v23 = vld [vmem:[%s1] sm:$0xff]
  %v24 = vld [vmem:[%s1 + $0x8] sm:$0xff]
  %v25 = vld [vmem:[%s1 + $0x10] sm:$0xff]
  %v26 = vld [vmem:[%s1 + $0x18] sm:$0xff]
  %v27 = vld [vmem:[%s1 + $0x20] sm:$0xff]
  %v28 = vld [vmem:[%s1 + $0x28] sm:$0xff]
  %v29 = vld [vmem:[%s1 + $0x30] sm:$0xff]
  %v30 = vld [vmem:[%s1 + $0x38] sm:$0xff]
  %v31 = vld [vmem:[%s2] sm:$0x3]
  %s32 = smul.u32 0, 8
  %s33 = scalar_lea.vmem %s0, %s32
  %v34 = vld [vmem:[%s33] sm:$0xff]
  %v35 = vld [vmem:[%s33 + $0x8] sm:$0xff]
  %v36 = vld [vmem:[%s33 + $0x10] sm:$0xff]
  %v37 = vld [vmem:[%s33 + $0x18] sm:$0xff]
  %v38 = vld [vmem:[%s33 + $0x20] sm:$0xff]
  %v39 = vld [vmem:[%s33 + $0x28] sm:$0xff]
  %v40 = vld [vmem:[%s33 + $0x30] sm:$0xff]
  %v41 = vld [vmem:[%s33 + $0x38] sm:$0xff]
  %v43 = vlaneseq
  %v44 = vshrl.u32 %v43, 7
  %v45 = vsub.s32 0, %v44
  %v46 = vrot.slane %v31, %v45
  %v47 = vlaneseq
  %v48 = vshrl.u32 %v47, 7
  %v49 = vsub.s32 1, %v48
  %v50 = vrot.slane %v31, %v49
  %vm53 = vcmask 261120
  %v55 = vsel %vm53, %v34, 0
  %v58 = vsel %vm53, %v35, 0
  %v61 = vsel %vm53, %v36, 0
  %v64 = vsel %vm53, %v37, 0
  %v67 = vsel %vm53, %v38, 0
  %v70 = vsel %vm53, %v39, 0
  %v73 = vsel %vm53, %v40, 0
  %v76 = vsel %vm53, %v41, 0
  %78 = vmatprep.subr.mxu0 %v24
  %79 = vmatpush1.msra.mxu0 %v23
  %80 = vmatprep.subr.mxu0 %v26
  %81 = vmatpush1.msra.mxu0 %v25
  %82 = vmatprep.subr.mxu0 %v28
  %83 = vmatpush1.msra.mxu0 %v27
  %84 = vmatprep.subr.mxu0 %v30
  %85 = vmatpush1.msra.mxu0 %v29
  %86 = vmatprep.subr.mxu0 0.0
  %87 = vmatpush1.msra.mxu0 0.0
  %88 = vmatprep.subr.mxu0 0.0
  %89 = vmatpush1.msra.mxu0 0.0
  %90 = vmatprep.subr.mxu0 0.0
  %91 = vmatpush1.msra.mxu0 0.0
  %92 = vmatprep.subr.mxu0 0.0
  %93 = vmatpush1.msra.mxu0 0.0
  %94 = vmatprep.subr.mxu0 0.0
  %95 = vmatpush1.msra.mxu0 0.0
  %96 = vmatprep.subr.mxu0 0.0
  %97 = vmatpush1.msra.mxu0 0.0
  %98 = vmatprep.subr.mxu0 0.0
  %99 = vmatpush1.msra.mxu0 0.0
  %100 = vmatprep.subr.mxu0 0.0
  %101 = vmatpush1.msra.mxu0 0.0
  %102 = vmatprep.subr.mxu0 0.0
  %103 = vmatpush1.msra.mxu0 0.0
  %104 = vmatprep.subr.mxu0 0.0
  %105 = vmatpush1.msra.mxu0 0.0
  %106 = vmatprep.subr.mxu0 0.0
  %107 = vmatpush1.msra.mxu0 0.0
  %108 = vmatprep.subr.mxu0 0.0
  %109 = vmatpush1.msra.mxu0 0.0
  %110 = vmatprep.subr.mxu0 0.0
  %111 = vmatpush1.msra.mxu0 0.0
  %112 = vmatprep.subr.mxu0 0.0
  %113 = vmatpush1.msra.mxu0 0.0
  %114 = vmatprep.subr.mxu0 0.0
  %115 = vmatpush1.msra.mxu0 0.0
  %116 = vmatprep.subr.mxu0 0.0
  %117 = vmatpush1.msra.mxu0 0.0
  %118 = vmatprep.subr.mxu0 0.0
  %119 = vmatpush1.msra.mxu0 0.0
  %120 = vmatprep.subr.mxu0 0.0
  %121 = vmatpush1.msra.mxu0 0.0
  %122 = vmatprep.subr.mxu0 0.0
  %123 = vmatpush1.msra.mxu0 0.0
  %124 = vmatprep.subr.mxu0 0.0
  %125 = vmatpush1.msra.mxu0 0.0
  %126 = vmatprep.subr.mxu0 0.0
  %127 = vmatpush1.msra.mxu0 0.0
  %128 = vmatprep.subr.mxu0 0.0
  %129 = vmatpush1.msra.mxu0 0.0
  %130 = vmatprep.subr.mxu0 0.0
  %131 = vmatpush1.msra.mxu0 0.0
  %132 = vmatprep.subr.mxu0 0.0
  %133 = vmatpush1.msra.mxu0 0.0
  %134 = vmatprep.subr.mxu0 0.0
  %135 = vmatpush1.msra.mxu0 0.0
  %136 = vmatprep.subr.mxu0 0.0
  %137 = vmatpush1.msra.mxu0 0.0
  %138 = vmatprep.subr.mxu0 0.0
  %139 = vmatpush1.msra.mxu0 0.0
  %140 = vmatprep.subr.mxu0 0.0
  %141 = vmatpush1.msra.mxu0 0.0
  %142 = vmatprep.mubr.f32.mxu0 0.0
  %143 = vmatmul.mubr.f32.gmra.mrb[0].mxu0 %v55
  %v144 = vpop.f32.mrb[0].mxu0
  %v145 = vadd.f32 %v46, %v144
  %v146 = vpop.f32.mrb[0].mxu0
  %v147 = vadd.f32 %v50, %v146
  %148 = vmatprep.mubr.f32.mxu0 0.0
  %149 = vmatmul.mubr.f32.gmra.mrb[0].mxu0 %v58
  %v150 = vpop.f32.mrb[0].mxu0
  %v151 = vadd.f32 %v46, %v150
  %v152 = vpop.f32.mrb[0].mxu0
  %v153 = vadd.f32 %v50, %v152
  %154 = vmatprep.mubr.f32.mxu0 0.0
  %155 = vmatmul.mubr.f32.gmra.mrb[0].mxu0 %v61
  %v156 = vpop.f32.mrb[0].mxu0
  %v157 = vadd.f32 %v46, %v156
  %v158 = vpop.f32.mrb[0].mxu0
  %v159 = vadd.f32 %v50, %v158
  %160 = vmatprep.mubr.f32.mxu0 0.0
  %161 = vmatmul.mubr.f32.gmra.mrb[0].mxu0 %v64
  %v162 = vpop.f32.mrb[0].mxu0
  %v163 = vadd.f32 %v46, %v162
  %v164 = vpop.f32.mrb[0].mxu0
  %v165 = vadd.f32 %v50, %v164
  %166 = vmatprep.mubr.f32.mxu0 0.0
  %167 = vmatmul.mubr.f32.gmra.mrb[0].mxu0 %v67
  %v168 = vpop.f32.mrb[0].mxu0
  %v169 = vadd.f32 %v46, %v168
  %v170 = vpop.f32.mrb[0].mxu0
  %v171 = vadd.f32 %v50, %v170
  %172 = vmatprep.mubr.f32.mxu0 0.0
  %173 = vmatmul.mubr.f32.gmra.mrb[0].mxu0 %v70
  %v174 = vpop.f32.mrb[0].mxu0
  %v175 = vadd.f32 %v46, %v174
  %v176 = vpop.f32.mrb[0].mxu0
  %v177 = vadd.f32 %v50, %v176
  %178 = vmatprep.mubr.f32.mxu0 0.0
  %179 = vmatmul.mubr.f32.gmra.mrb[0].mxu0 %v73
  %v180 = vpop.f32.mrb[0].mxu0
  %v181 = vadd.f32 %v46, %v180
  %v182 = vpop.f32.mrb[0].mxu0
  %v183 = vadd.f32 %v50, %v182
  %184 = vmatprep.mubr.f32.mxu0 0.0
  %185 = vmatmul.mubr.f32.gmra.mrb[0].mxu0 %v76
  %v186 = vpop.f32.mrb[0].mxu0
  %v187 = vadd.f32 %v46, %v186
  %v188 = vpop.f32.mrb[0].mxu0
  %v189 = vadd.f32 %v50, %v188
  %190 = vdwg.mxu0
  %s191 = smul.u32 0, 2
  %s192 = smul.addr %s191, 8
  %s193 = scalar_lea.vmem [#allocation2], %s192
  %194 = vst [vmem:[%s193] sm:$0xff] %v145
  %195 = vst [vmem:[%s193 + $0x8] sm:$0xff] %v147
  %196 = vst [vmem:[%s193 + $0x10] sm:$0xff] %v151
  %197 = vst [vmem:[%s193 + $0x18] sm:$0xff] %v153
  %198 = vst [vmem:[%s193 + $0x20] sm:$0xff] %v157
  %199 = vst [vmem:[%s193 + $0x28] sm:$0xff] %v159
  %200 = vst [vmem:[%s193 + $0x30] sm:$0xff] %v163
  %201 = vst [vmem:[%s193 + $0x38] sm:$0xff] %v165
  %202 = vst [vmem:[%s193 + $0x40] sm:$0xff] %v169
  %203 = vst [vmem:[%s193 + $0x48] sm:$0xff] %v171
  %204 = vst [vmem:[%s193 + $0x50] sm:$0xff] %v175
  %205 = vst [vmem:[%s193 + $0x58] sm:$0xff] %v177
  %206 = vst [vmem:[%s193 + $0x60] sm:$0xff] %v181
  %207 = vst [vmem:[%s193 + $0x68] sm:$0xff] %v183
  %208 = vst [vmem:[%s193 + $0x70] sm:$0xff] %v187
  %209 = vst [vmem:[%s193 + $0x78] sm:$0xff] %v189
  %v210 = vld [vmem:[%s3] sm:$0xff]
  %v211 = vld [vmem:[%s3 + $0x8] sm:$0xff]
  %v212 = vld [vmem:[%s3 + $0x10] sm:$0xff]
  %v213 = vld [vmem:[%s3 + $0x18] sm:$0xff]
  %v214 = vld [vmem:[%s3 + $0x20] sm:$0xff]
  %v215 = vld [vmem:[%s3 + $0x28] sm:$0xff]
  %v216 = vld [vmem:[%s3 + $0x30] sm:$0xff]
  %v217 = vld [vmem:[%s3 + $0x38] sm:$0xff]
  %v218 = vld [vmem:[%s3 + $0x40] sm:$0xff]
  %v219 = vld [vmem:[%s3 + $0x48] sm:$0xff]
  %v220 = vld [vmem:[%s3 + $0x50] sm:$0xff]
  %v221 = vld [vmem:[%s3 + $0x58] sm:$0xff]
  %v222 = vld [vmem:[%s3 + $0x60] sm:$0xff]
  %v223 = vld [vmem:[%s3 + $0x68] sm:$0xff]
  %v224 = vld [vmem:[%s3 + $0x70] sm:$0xff]
  %v225 = vld [vmem:[%s3 + $0x78] sm:$0xff]
  %v226 = vld [vmem:[#allocation2] sm:$0xff]
  %v227 = vld [vmem:[#allocation2 + $0x8] sm:$0xff]
  %vm228 = vcmask 523264
  %v230 = vsel %vm228, 0.0, 0
  %232 = vmatprep.subr.mxu0 %v211
  %233 = vmatpush1.msra.mxu0 %v210
  %234 = vmatprep.subr.mxu0 %v213
  %235 = vmatpush1.msra.mxu0 %v212
  %236 = vmatprep.subr.mxu0 %v215
  %237 = vmatpush1.msra.mxu0 %v214
  %238 = vmatprep.subr.mxu0 %v217
  %239 = vmatpush1.msra.mxu0 %v216
  %240 = vmatprep.subr.mxu0 %v219
  %241 = vmatpush1.msra.mxu0 %v218
  %242 = vmatprep.subr.mxu0 %v221
  %243 = vmatpush1.msra.mxu0 %v220
  %244 = vmatprep.subr.mxu0 %v223
  %245 = vmatpush1.msra.mxu0 %v222
  %246 = vmatprep.subr.mxu0 %v225
  %247 = vmatpush1.msra.mxu0 %v224
  %248 = vmatprep.subr.mxu0 0.0
  %249 = vmatpush1.msra.mxu0 0.0
  %250 = vmatprep.subr.mxu0 0.0
  %251 = vmatpush1.msra.mxu0 0.0
  %252 = vmatprep.subr.mxu0 0.0
  %253 = vmatpush1.msra.mxu0 0.0
  %254 = vmatprep.subr.mxu0 0.0
  %255 = vmatpush1.msra.mxu0 0.0
  %256 = vmatprep.subr.mxu0 0.0
  %257 = vmatpush1.msra.mxu0 0.0
  %258 = vmatprep.subr.mxu0 0.0
  %259 = vmatpush1.msra.mxu0 0.0
  %260 = vmatprep.subr.mxu0 0.0
  %261 = vmatpush1.msra.mxu0 0.0
  %262 = vmatprep.subr.mxu0 0.0
  %263 = vmatpush1.msra.mxu0 0.0
  %264 = vmatprep.subr.mxu0 0.0
  %265 = vmatpush1.msra.mxu0 0.0
  %266 = vmatprep.subr.mxu0 0.0
  %267 = vmatpush1.msra.mxu0 0.0
  %268 = vmatprep.subr.mxu0 0.0
  %269 = vmatpush1.msra.mxu0 0.0
  %270 = vmatprep.subr.mxu0 0.0
  %271 = vmatpush1.msra.mxu0 0.0
  %272 = vmatprep.subr.mxu0 0.0
  %273 = vmatpush1.msra.mxu0 0.0
  %274 = vmatprep.subr.mxu0 0.0
  %275 = vmatpush1.msra.mxu0 0.0
  %276 = vmatprep.subr.mxu0 0.0
  %277 = vmatpush1.msra.mxu0 0.0
  %278 = vmatprep.subr.mxu0 0.0
  %279 = vmatpush1.msra.mxu0 0.0
  %280 = vmatprep.subr.mxu0 0.0
  %281 = vmatpush1.msra.mxu0 0.0
  %282 = vmatprep.subr.mxu0 0.0
  %283 = vmatpush1.msra.mxu0 0.0
  %284 = vmatprep.subr.mxu0 0.0
  %285 = vmatpush1.msra.mxu0 0.0
  %286 = vmatprep.subr.mxu0 0.0
  %287 = vmatpush1.msra.mxu0 0.0
  %288 = vmatprep.subr.mxu0 0.0
  %289 = vmatpush1.msra.mxu0 0.0
  %290 = vmatprep.subr.mxu0 0.0
  %291 = vmatpush1.msra.mxu0 0.0
  %292 = vmatprep.subr.mxu0 0.0
  %293 = vmatpush1.msra.mxu0 0.0
  %294 = vmatprep.subr.mxu0 0.0
  %295 = vmatpush1.msra.mxu0 0.0
  %296 = vmatprep.mubr.f32.mxu0 0.0
  %297 = vmatmul.mubr.f32.gmra.mrb[0].mxu0 %v230
  %v298 = vpop.f32.mrb[0].mxu0
  %v299 = vadd.f32 %v226, %v298
  %v300 = vpop.f32.mrb[0].mxu0
  %v301 = vadd.f32 %v227, %v300
  %302 = vdwg.mxu0
  %v303 = vxor.u32 %v299, 2147483648
  %v304 = vxor.u32 %v301, 2147483648
  %v305 = vmul.f32 %v303, 1.442695
  %v306 = vpow.pop %v305
  %v307 = vmul.f32 %v304, 1.442695
  %v308 = vpow.pop %v307
  %v309 = vadd.f32 %v306, 1.0
  %v310 = vadd.f32 %v308, 1.0
  %v311 = vrcp.pop %v309
  %v312 = vmul.f32 1.0, %v311
  %v313 = vrcp.pop %v310
  %v314 = vmul.f32 1.0, %v313
  %v315 = vtanh.pop %v301
  %v316 = vmul.f32 %v312, 0.0
  %318 = vrot.lane.b32.xlu0 %v315, 64
  %v319 = vpop.permute.xlu0 %318
  %v321 = vmul.f32 %v312, %v319
  %323 = vrot.lane.b32.xlu0 %v321, 64
  %v324 = vpop.permute.xlu0 %323
  %v326 = vadd.f32 %v316, %v324
  %v327 = vtanh.pop %v326
  %329 = vrot.lane.b32.xlu0 %v327, 64
  %v330 = vpop.permute.xlu0 %329
  %v332 = vmul.f32 %v314, %v330
  %333 = vst.msk [vmem:[#allocation3] sm:$0xff] %vm228, %v332
  %s334 = scalar_lea.vmem [#allocation2], 16
  %v335 = vld [vmem:[%s334] sm:$0xff]
  %v336 = vld [vmem:[%s334 + $0x8] sm:$0xff]
  %v338 = vsel %vm228, %v332, 0
  %340 = vmatprep.subr.mxu0 %v211
  %341 = vmatpush1.msra.mxu0 %v210
  %342 = vmatprep.subr.mxu0 %v213
  %343 = vmatpush1.msra.mxu0 %v212
  %344 = vmatprep.subr.mxu0 %v215
  %345 = vmatpush1.msra.mxu0 %v214
  %346 = vmatprep.subr.mxu0 %v217
  %347 = vmatpush1.msra.mxu0 %v216
  %348 = vmatprep.subr.mxu0 %v219
  %349 = vmatpush1.msra.mxu0 %v218
  %350 = vmatprep.subr.mxu0 %v221
  %351 = vmatpush1.msra.mxu0 %v220
  %352 = vmatprep.subr.mxu0 %v223
  %353 = vmatpush1.msra.mxu0 %v222
  %354 = vmatprep.subr.mxu0 %v225
  %355 = vmatpush1.msra.mxu0 %v224
  %356 = vmatprep.subr.mxu0 0.0
  %357 = vmatpush1.msra.mxu0 0.0
  %358 = vmatprep.subr.mxu0 0.0
  %359 = vmatpush1.msra.mxu0 0.0
  %360 = vmatprep.subr.mxu0 0.0
  %361 = vmatpush1.msra.mxu0 0.0
  %362 = vmatprep.subr.mxu0 0.0
  %363 = vmatpush1.msra.mxu0 0.0
  %364 = vmatprep.subr.mxu0 0.0
  %365 = vmatpush1.msra.mxu0 0.0
  %366 = vmatprep.subr.mxu0 0.0
  %367 = vmatpush1.msra.mxu0 0.0
  %368 = vmatprep.subr.mxu0 0.0
  %369 = vmatpush1.msra.mxu0 0.0
  %370 = vmatprep.subr.mxu0 0.0
  %371 = vmatpush1.msra.mxu0 0.0
  %372 = vmatprep.subr.mxu0 0.0
  %373 = vmatpush1.msra.mxu0 0.0
  %374 = vmatprep.subr.mxu0 0.0
  %375 = vmatpush1.msra.mxu0 0.0
  %376 = vmatprep.subr.mxu0 0.0
  %377 = vmatpush1.msra.mxu0 0.0
  %378 = vmatprep.subr.mxu0 0.0
  %379 = vmatpush1.msra.mxu0 0.0
  %380 = vmatprep.subr.mxu0 0.0
  %381 = vmatpush1.msra.mxu0 0.0
  %382 = vmatprep.subr.mxu0 0.0
  %383 = vmatpush1.msra.mxu0 0.0
  %384 = vmatprep.subr.mxu0 0.0
  %385 = vmatpush1.msra.mxu0 0.0
  %386 = vmatprep.subr.mxu0 0.0
  %387 = vmatpush1.msra.mxu0 0.0
  %388 = vmatprep.subr.mxu0 0.0
  %389 = vmatpush1.msra.mxu0 0.0
  %390 = vmatprep.subr.mxu0 0.0
  %391 = vmatpush1.msra.mxu0 0.0
  %392 = vmatprep.subr.mxu0 0.0
  %393 = vmatpush1.msra.mxu0 0.0
  %394 = vmatprep.subr.mxu0 0.0
  %395 = vmatpush1.msra.mxu0 0.0
  %396 = vmatprep.subr.mxu0 0.0
  %397 = vmatpush1.msra.mxu0 0.0
  %398 = vmatprep.subr.mxu0 0.0
  %399 = vmatpush1.msra.mxu0 0.0
  %400 = vmatprep.subr.mxu0 0.0
  %401 = vmatpush1.msra.mxu0 0.0
  %402 = vmatprep.subr.mxu0 0.0
  %403 = vmatpush1.msra.mxu0 0.0
  %404 = vmatprep.mubr.f32.mxu0 0.0
  %405 = vmatmul.mubr.f32.gmra.mrb[0].mxu0 %v338
  %v406 = vpop.f32.mrb[0].mxu0
  %v407 = vadd.f32 %v335, %v406
  %v408 = vpop.f32.mrb[0].mxu0
  %v409 = vadd.f32 %v336, %v408
  %410 = vdwg.mxu0
  %v411 = vxor.u32 %v407, 2147483648
  %v412 = vxor.u32 %v409, 2147483648
  %v413 = vmul.f32 %v411, 1.442695
  %v414 = vpow.pop %v413
  %v415 = vmul.f32 %v412, 1.442695
  %v416 = vpow.pop %v415
  %v417 = vadd.f32 %v414, 1.0
  %v418 = vadd.f32 %v416, 1.0
  %v419 = vrcp.pop %v417
  %v420 = vmul.f32 1.0, %v419
  %v421 = vrcp.pop %v418
  %v422 = vmul.f32 1.0, %v421
  %v423 = vtanh.pop %v409
  %v424 = vmul.f32 %v420, %v326
  %426 = vrot.lane.b32.xlu0 %v423, 64
  %v427 = vpop.permute.xlu0 %426
  %v429 = vmul.f32 %v420, %v427
  %431 = vrot.lane.b32.xlu0 %v429, 64
  %v432 = vpop.permute.xlu0 %431
  %v434 = vadd.f32 %v424, %v432
  %v435 = vtanh.pop %v434
  %437 = vrot.lane.b32.xlu0 %v435, 64
  %v438 = vpop.permute.xlu0 %437
  %v440 = vmul.f32 %v422, %v438
  %s441 = scalar_lea.vmem [#allocation3], 8
  %442 = vst.msk [vmem:[%s441] sm:$0xff] %vm228, %v440
  %s443 = scalar_lea.vmem [#allocation2], 32
  %v444 = vld [vmem:[%s443] sm:$0xff]
  %v445 = vld [vmem:[%s443 + $0x8] sm:$0xff]
  %v447 = vsel %vm228, %v440, 0
  %449 = vmatprep.subr.mxu0 %v211
  %450 = vmatpush1.msra.mxu0 %v210
  %451 = vmatprep.subr.mxu0 %v213
  %452 = vmatpush1.msra.mxu0 %v212
  %453 = vmatprep.subr.mxu0 %v215
  %454 = vmatpush1.msra.mxu0 %v214
  %455 = vmatprep.subr.mxu0 %v217
  %456 = vmatpush1.msra.mxu0 %v216
  %457 = vmatprep.subr.mxu0 %v219
  %458 = vmatpush1.msra.mxu0 %v218
  %459 = vmatprep.subr.mxu0 %v221
  %460 = vmatpush1.msra.mxu0 %v220
  %461 = vmatprep.subr.mxu0 %v223
  %462 = vmatpush1.msra.mxu0 %v222
  %463 = vmatprep.subr.mxu0 %v225
  %464 = vmatpush1.msra.mxu0 %v224
  %465 = vmatprep.subr.mxu0 0.0
  %466 = vmatpush1.msra.mxu0 0.0
  %467 = vmatprep.subr.mxu0 0.0
  %468 = vmatpush1.msra.mxu0 0.0
  %469 = vmatprep.subr.mxu0 0.0
  %470 = vmatpush1.msra.mxu0 0.0
  %471 = vmatprep.subr.mxu0 0.0
  %472 = vmatpush1.msra.mxu0 0.0
  %473 = vmatprep.subr.mxu0 0.0
  %474 = vmatpush1.msra.mxu0 0.0
  %475 = vmatprep.subr.mxu0 0.0
  %476 = vmatpush1.msra.mxu0 0.0
  %477 = vmatprep.subr.mxu0 0.0
  %478 = vmatpush1.msra.mxu0 0.0
  %479 = vmatprep.subr.mxu0 0.0
  %480 = vmatpush1.msra.mxu0 0.0
  %481 = vmatprep.subr.mxu0 0.0
  %482 = vmatpush1.msra.mxu0 0.0
  %483 = vmatprep.subr.mxu0 0.0
  %484 = vmatpush1.msra.mxu0 0.0
  %485 = vmatprep.subr.mxu0 0.0
  %486 = vmatpush1.msra.mxu0 0.0
  %487 = vmatprep.subr.mxu0 0.0
  %488 = vmatpush1.msra.mxu0 0.0
  %489 = vmatprep.subr.mxu0 0.0
  %490 = vmatpush1.msra.mxu0 0.0
  %491 = vmatprep.subr.mxu0 0.0
  %492 = vmatpush1.msra.mxu0 0.0
  %493 = vmatprep.subr.mxu0 0.0
  %494 = vmatpush1.msra.mxu0 0.0
  %495 = vmatprep.subr.mxu0 0.0
  %496 = vmatpush1.msra.mxu0 0.0
  %497 = vmatprep.subr.mxu0 0.0
  %498 = vmatpush1.msra.mxu0 0.0
  %499 = vmatprep.subr.mxu0 0.0
  %500 = vmatpush1.msra.mxu0 0.0
  %501 = vmatprep.subr.mxu0 0.0
  %502 = vmatpush1.msra.mxu0 0.0
  %503 = vmatprep.subr.mxu0 0.0
  %504 = vmatpush1.msra.mxu0 0.0
  %505 = vmatprep.subr.mxu0 0.0
  %506 = vmatpush1.msra.mxu0 0.0
  %507 = vmatprep.subr.mxu0 0.0
  %508 = vmatpush1.msra.mxu0 0.0
  %509 = vmatprep.subr.mxu0 0.0
  %510 = vmatpush1.msra.mxu0 0.0
  %511 = vmatprep.subr.mxu0 0.0
  %512 = vmatpush1.msra.mxu0 0.0
  %513 = vmatprep.mubr.f32.mxu0 0.0
  %514 = vmatmul.mubr.f32.gmra.mrb[0].mxu0 %v447
  %v515 = vpop.f32.mrb[0].mxu0
  %v516 = vadd.f32 %v444, %v515
  %v517 = vpop.f32.mrb[0].mxu0
  %v518 = vadd.f32 %v445, %v517
  %519 = vdwg.mxu0
  %v520 = vxor.u32 %v516, 2147483648
  %v521 = vxor.u32 %v518, 2147483648
  %v522 = vmul.f32 %v520, 1.442695
  %v523 = vpow.pop %v522
  %v524 = vmul.f32 %v521, 1.442695
  %v525 = vpow.pop %v524
  %v526 = vadd.f32 %v523, 1.0
  %v527 = vadd.f32 %v525, 1.0
  %v528 = vrcp.pop %v526
  %v529 = vmul.f32 1.0, %v528
  %v530 = vrcp.pop %v527
  %v531 = vmul.f32 1.0, %v530
  %v532 = vtanh.pop %v518
  %v533 = vmul.f32 %v529, %v434
  %535 = vrot.lane.b32.xlu0 %v532, 64
  %v536 = vpop.permute.xlu0 %535
  %v538 = vmul.f32 %v529, %v536
  %540 = vrot.lane.b32.xlu0 %v538, 64
  %v541 = vpop.permute.xlu0 %540
  %v543 = vadd.f32 %v533, %v541
  %v544 = vtanh.pop %v543
  %546 = vrot.lane.b32.xlu0 %v544, 64
  %v547 = vpop.permute.xlu0 %546
  %v549 = vmul.f32 %v531, %v547
  %s550 = scalar_lea.vmem [#allocation3], 16
  %551 = vst.msk [vmem:[%s550] sm:$0xff] %vm228, %v549
  %s552 = scalar_lea.vmem [#allocation2], 48
  %v553 = vld [vmem:[%s552] sm:$0xff]
  %v554 = vld [vmem:[%s552 + $0x8] sm:$0xff]
  %v556 = vsel %vm228, %v549, 0
  %558 = vmatprep.subr.mxu0 %v211
  %559 = vmatpush1.msra.mxu0 %v210
  %560 = vmatprep.subr.mxu0 %v213
  %561 = vmatpush1.msra.mxu0 %v212
  %562 = vmatprep.subr.mxu0 %v215
  %563 = vmatpush1.msra.mxu0 %v214
  %564 = vmatprep.subr.mxu0 %v217
  %565 = vmatpush1.msra.mxu0 %v216
  %566 = vmatprep.subr.mxu0 %v219
  %567 = vmatpush1.msra.mxu0 %v218
  %568 = vmatprep.subr.mxu0 %v221
  %569 = vmatpush1.msra.mxu0 %v220
  %570 = vmatprep.subr.mxu0 %v223
  %571 = vmatpush1.msra.mxu0 %v222
  %572 = vmatprep.subr.mxu0 %v225
  %573 = vmatpush1.msra.mxu0 %v224
  %574 = vmatprep.subr.mxu0 0.0
  %575 = vmatpush1.msra.mxu0 0.0
  %576 = vmatprep.subr.mxu0 0.0
  %577 = vmatpush1.msra.mxu0 0.0
  %578 = vmatprep.subr.mxu0 0.0
  %579 = vmatpush1.msra.mxu0 0.0
  %580 = vmatprep.subr.mxu0 0.0
  %581 = vmatpush1.msra.mxu0 0.0
  %582 = vmatprep.subr.mxu0 0.0
  %583 = vmatpush1.msra.mxu0 0.0
  %584 = vmatprep.subr.mxu0 0.0
  %585 = vmatpush1.msra.mxu0 0.0
  %586 = vmatprep.subr.mxu0 0.0
  %587 = vmatpush1.msra.mxu0 0.0
  %588 = vmatprep.subr.mxu0 0.0
  %589 = vmatpush1.msra.mxu0 0.0
  %590 = vmatprep.subr.mxu0 0.0
  %591 = vmatpush1.msra.mxu0 0.0
  %592 = vmatprep.subr.mxu0 0.0
  %593 = vmatpush1.msra.mxu0 0.0
  %594 = vmatprep.subr.mxu0 0.0
  %595 = vmatpush1.msra.mxu0 0.0
  %596 = vmatprep.subr.mxu0 0.0
  %597 = vmatpush1.msra.mxu0 0.0
  %598 = vmatprep.subr.mxu0 0.0
  %599 = vmatpush1.msra.mxu0 0.0
  %600 = vmatprep.subr.mxu0 0.0
  %601 = vmatpush1.msra.mxu0 0.0
  %602 = vmatprep.subr.mxu0 0.0
  %603 = vmatpush1.msra.mxu0 0.0
  %604 = vmatprep.subr.mxu0 0.0
  %605 = vmatpush1.msra.mxu0 0.0
  %606 = vmatprep.subr.mxu0 0.0
  %607 = vmatpush1.msra.mxu0 0.0
  %608 = vmatprep.subr.mxu0 0.0
  %609 = vmatpush1.msra.mxu0 0.0
  %610 = vmatprep.subr.mxu0 0.0
  %611 = vmatpush1.msra.mxu0 0.0
  %612 = vmatprep.subr.mxu0 0.0
  %613 = vmatpush1.msra.mxu0 0.0
  %614 = vmatprep.subr.mxu0 0.0
  %615 = vmatpush1.msra.mxu0 0.0
  %616 = vmatprep.subr.mxu0 0.0
  %617 = vmatpush1.msra.mxu0 0.0
  %618 = vmatprep.subr.mxu0 0.0
  %619 = vmatpush1.msra.mxu0 0.0
  %620 = vmatprep.subr.mxu0 0.0
  %621 = vmatpush1.msra.mxu0 0.0
  %622 = vmatprep.mubr.f32.mxu0 0.0
  %623 = vmatmul.mubr.f32.gmra.mrb[0].mxu0 %v556
  %v624 = vpop.f32.mrb[0].mxu0
  %v625 = vadd.f32 %v553, %v624
  %v626 = vpop.f32.mrb[0].mxu0
  %v627 = vadd.f32 %v554, %v626
  %628 = vdwg.mxu0
  %v629 = vxor.u32 %v625, 2147483648
  %v630 = vxor.u32 %v627, 2147483648
  %v631 = vmul.f32 %v629, 1.442695
  %v632 = vpow.pop %v631
  %v633 = vmul.f32 %v630, 1.442695
  %v634 = vpow.pop %v633
  %v635 = vadd.f32 %v632, 1.0
  %v636 = vadd.f32 %v634, 1.0
  %v637 = vrcp.pop %v635
  %v638 = vmul.f32 1.0, %v637
  %v639 = vrcp.pop %v636
  %v640 = vmul.f32 1.0, %v639
  %v641 = vtanh.pop %v627
  %v642 = vmul.f32 %v638, %v543
  %644 = vrot.lane.b32.xlu0 %v641, 64
  %v645 = vpop.permute.xlu0 %644
  %v647 = vmul.f32 %v638, %v645
  %649 = vrot.lane.b32.xlu0 %v647, 64
  %v650 = vpop.permute.xlu0 %649
  %v652 = vadd.f32 %v642, %v650
  %v653 = vtanh.pop %v652
  %655 = vrot.lane.b32.xlu0 %v653, 64
  %v656 = vpop.permute.xlu0 %655
  %v658 = vmul.f32 %v640, %v656
  %s659 = scalar_lea.vmem [#allocation3], 24
  %660 = vst.msk [vmem:[%s659] sm:$0xff] %vm228, %v658
  %s661 = scalar_lea.vmem [#allocation2], 64
  %v662 = vld [vmem:[%s661] sm:$0xff]
  %v663 = vld [vmem:[%s661 + $0x8] sm:$0xff]
  %v665 = vsel %vm228, %v658, 0
  %667 = vmatprep.subr.mxu0 %v211
  %668 = vmatpush1.msra.mxu0 %v210
  %669 = vmatprep.subr.mxu0 %v213
  %670 = vmatpush1.msra.mxu0 %v212
  %671 = vmatprep.subr.mxu0 %v215
  %672 = vmatpush1.msra.mxu0 %v214
  %673 = vmatprep.subr.mxu0 %v217
  %674 = vmatpush1.msra.mxu0 %v216
  %675 = vmatprep.subr.mxu0 %v219
  %676 = vmatpush1.msra.mxu0 %v218
  %677 = vmatprep.subr.mxu0 %v221
  %678 = vmatpush1.msra.mxu0 %v220
  %679 = vmatprep.subr.mxu0 %v223
  %680 = vmatpush1.msra.mxu0 %v222
  %681 = vmatprep.subr.mxu0 %v225
  %682 = vmatpush1.msra.mxu0 %v224
  %683 = vmatprep.subr.mxu0 0.0
  %684 = vmatpush1.msra.mxu0 0.0
  %685 = vmatprep.subr.mxu0 0.0
  %686 = vmatpush1.msra.mxu0 0.0
  %687 = vmatprep.subr.mxu0 0.0
  %688 = vmatpush1.msra.mxu0 0.0
  %689 = vmatprep.subr.mxu0 0.0
  %690 = vmatpush1.msra.mxu0 0.0
  %691 = vmatprep.subr.mxu0 0.0
  %692 = vmatpush1.msra.mxu0 0.0
  %693 = vmatprep.subr.mxu0 0.0
  %694 = vmatpush1.msra.mxu0 0.0
  %695 = vmatprep.subr.mxu0 0.0
  %696 = vmatpush1.msra.mxu0 0.0
  %697 = vmatprep.subr.mxu0 0.0
  %698 = vmatpush1.msra.mxu0 0.0
  %699 = vmatprep.subr.mxu0 0.0
  %700 = vmatpush1.msra.mxu0 0.0
  %701 = vmatprep.subr.mxu0 0.0
  %702 = vmatpush1.msra.mxu0 0.0
  %703 = vmatprep.subr.mxu0 0.0
  %704 = vmatpush1.msra.mxu0 0.0
  %705 = vmatprep.subr.mxu0 0.0
  %706 = vmatpush1.msra.mxu0 0.0
  %707 = vmatprep.subr.mxu0 0.0
  %708 = vmatpush1.msra.mxu0 0.0
  %709 = vmatprep.subr.mxu0 0.0
  %710 = vmatpush1.msra.mxu0 0.0
  %711 = vmatprep.subr.mxu0 0.0
  %712 = vmatpush1.msra.mxu0 0.0
  %713 = vmatprep.subr.mxu0 0.0
  %714 = vmatpush1.msra.mxu0 0.0
  %715 = vmatprep.subr.mxu0 0.0
  %716 = vmatpush1.msra.mxu0 0.0
  %717 = vmatprep.subr.mxu0 0.0
  %718 = vmatpush1.msra.mxu0 0.0
  %719 = vmatprep.subr.mxu0 0.0
  %720 = vmatpush1.msra.mxu0 0.0
  %721 = vmatprep.subr.mxu0 0.0
  %722 = vmatpush1.msra.mxu0 0.0
  %723 = vmatprep.subr.mxu0 0.0
  %724 = vmatpush1.msra.mxu0 0.0
  %725 = vmatprep.subr.mxu0 0.0
  %726 = vmatpush1.msra.mxu0 0.0
  %727 = vmatprep.subr.mxu0 0.0
  %728 = vmatpush1.msra.mxu0 0.0
  %729 = vmatprep.subr.mxu0 0.0
  %730 = vmatpush1.msra.mxu0 0.0
  %731 = vmatprep.mubr.f32.mxu0 0.0
  %732 = vmatmul.mubr.f32.gmra.mrb[0].mxu0 %v665
  %v733 = vpop.f32.mrb[0].mxu0
  %v734 = vadd.f32 %v662, %v733
  %v735 = vpop.f32.mrb[0].mxu0
  %v736 = vadd.f32 %v663, %v735
  %737 = vdwg.mxu0
  %v738 = vxor.u32 %v734, 2147483648
  %v739 = vxor.u32 %v736, 2147483648
  %v740 = vmul.f32 %v738, 1.442695
  %v741 = vpow.pop %v740
  %v742 = vmul.f32 %v739, 1.442695
  %v743 = vpow.pop %v742
  %v744 = vadd.f32 %v741, 1.0
  %v745 = vadd.f32 %v743, 1.0
  %v746 = vrcp.pop %v744
  %v747 = vmul.f32 1.0, %v746
  %v748 = vrcp.pop %v745
  %v749 = vmul.f32 1.0, %v748
  %v750 = vtanh.pop %v736
  %v751 = vmul.f32 %v747, %v652
  %753 = vrot.lane.b32.xlu0 %v750, 64
  %v754 = vpop.permute.xlu0 %753
  %v756 = vmul.f32 %v747, %v754
  %758 = vrot.lane.b32.xlu0 %v756, 64
  %v759 = vpop.permute.xlu0 %758
  %v761 = vadd.f32 %v751, %v759
  %v762 = vtanh.pop %v761
  %764 = vrot.lane.b32.xlu0 %v762, 64
  %v765 = vpop.permute.xlu0 %764
  %v767 = vmul.f32 %v749, %v765
  %s768 = scalar_lea.vmem [#allocation3], 32
  %769 = vst.msk [vmem:[%s768] sm:$0xff] %vm228, %v767
  %s770 = scalar_lea.vmem [#allocation2], 80
  %v771 = vld [vmem:[%s770] sm:$0xff]
  %v772 = vld [vmem:[%s770 + $0x8] sm:$0xff]
  %v774 = vsel %vm228, %v767, 0
  %776 = vmatprep.subr.mxu0 %v211
  %777 = vmatpush1.msra.mxu0 %v210
  %778 = vmatprep.subr.mxu0 %v213
  %779 = vmatpush1.msra.mxu0 %v212
  %780 = vmatprep.subr.mxu0 %v215
  %781 = vmatpush1.msra.mxu0 %v214
  %782 = vmatprep.subr.mxu0 %v217
  %783 = vmatpush1.msra.mxu0 %v216
  %784 = vmatprep.subr.mxu0 %v219
  %785 = vmatpush1.msra.mxu0 %v218
  %786 = vmatprep.subr.mxu0 %v221
  %787 = vmatpush1.msra.mxu0 %v220
  %788 = vmatprep.subr.mxu0 %v223
  %789 = vmatpush1.msra.mxu0 %v222
  %790 = vmatprep.subr.mxu0 %v225
  %791 = vmatpush1.msra.mxu0 %v224
  %792 = vmatprep.subr.mxu0 0.0
  %793 = vmatpush1.msra.mxu0 0.0
  %794 = vmatprep.subr.mxu0 0.0
  %795 = vmatpush1.msra.mxu0 0.0
  %796 = vmatprep.subr.mxu0 0.0
  %797 = vmatpush1.msra.mxu0 0.0
  %798 = vmatprep.subr.mxu0 0.0
  %799 = vmatpush1.msra.mxu0 0.0
  %800 = vmatprep.subr.mxu0 0.0
  %801 = vmatpush1.msra.mxu0 0.0
  %802 = vmatprep.subr.mxu0 0.0
  %803 = vmatpush1.msra.mxu0 0.0
  %804 = vmatprep.subr.mxu0 0.0
  %805 = vmatpush1.msra.mxu0 0.0
  %806 = vmatprep.subr.mxu0 0.0
  %807 = vmatpush1.msra.mxu0 0.0
  %808 = vmatprep.subr.mxu0 0.0
  %809 = vmatpush1.msra.mxu0 0.0
  %810 = vmatprep.subr.mxu0 0.0
  %811 = vmatpush1.msra.mxu0 0.0
  %812 = vmatprep.subr.mxu0 0.0
  %813 = vmatpush1.msra.mxu0 0.0
  %814 = vmatprep.subr.mxu0 0.0
  %815 = vmatpush1.msra.mxu0 0.0
  %816 = vmatprep.subr.mxu0 0.0
  %817 = vmatpush1.msra.mxu0 0.0
  %818 = vmatprep.subr.mxu0 0.0
  %819 = vmatpush1.msra.mxu0 0.0
  %820 = vmatprep.subr.mxu0 0.0
  %821 = vmatpush1.msra.mxu0 0.0
  %822 = vmatprep.subr.mxu0 0.0
  %823 = vmatpush1.msra.mxu0 0.0
  %824 = vmatprep.subr.mxu0 0.0
  %825 = vmatpush1.msra.mxu0 0.0
  %826 = vmatprep.subr.mxu0 0.0
  %827 = vmatpush1.msra.mxu0 0.0
  %828 = vmatprep.subr.mxu0 0.0
  %829 = vmatpush1.msra.mxu0 0.0
  %830 = vmatprep.subr.mxu0 0.0
  %831 = vmatpush1.msra.mxu0 0.0
  %832 = vmatprep.subr.mxu0 0.0
  %833 = vmatpush1.msra.mxu0 0.0
  %834 = vmatprep.subr.mxu0 0.0
  %835 = vmatpush1.msra.mxu0 0.0
  %836 = vmatprep.subr.mxu0 0.0
  %837 = vmatpush1.msra.mxu0 0.0
  %838 = vmatprep.subr.mxu0 0.0
  %839 = vmatpush1.msra.mxu0 0.0
  %840 = vmatprep.mubr.f32.mxu0 0.0
  %841 = vmatmul.mubr.f32.gmra.mrb[0].mxu0 %v774
  %v842 = vpop.f32.mrb[0].mxu0
  %v843 = vadd.f32 %v771, %v842
  %v844 = vpop.f32.mrb[0].mxu0
  %v845 = vadd.f32 %v772, %v844
  %846 = vdwg.mxu0
  %v847 = vxor.u32 %v843, 2147483648
  %v848 = vxor.u32 %v845, 2147483648
  %v849 = vmul.f32 %v847, 1.442695
  %v850 = vpow.pop %v849
  %v851 = vmul.f32 %v848, 1.442695
  %v852 = vpow.pop %v851
  %v853 = vadd.f32 %v850, 1.0
  %v854 = vadd.f32 %v852, 1.0
  %v855 = vrcp.pop %v853
  %v856 = vmul.f32 1.0, %v855
  %v857 = vrcp.pop %v854
  %v858 = vmul.f32 1.0, %v857
  %v859 = vtanh.pop %v845
  %v860 = vmul.f32 %v856, %v761
  %862 = vrot.lane.b32.xlu0 %v859, 64
  %v863 = vpop.permute.xlu0 %862
  %v865 = vmul.f32 %v856, %v863
  %867 = vrot.lane.b32.xlu0 %v865, 64
  %v868 = vpop.permute.xlu0 %867
  %v870 = vadd.f32 %v860, %v868
  %v871 = vtanh.pop %v870
  %873 = vrot.lane.b32.xlu0 %v871, 64
  %v874 = vpop.permute.xlu0 %873
  %v876 = vmul.f32 %v858, %v874
  %s877 = scalar_lea.vmem [#allocation3], 40
  %878 = vst.msk [vmem:[%s877] sm:$0xff] %vm228, %v876
  %s879 = scalar_lea.vmem [#allocation2], 96
  %v880 = vld [vmem:[%s879] sm:$0xff]
  %v881 = vld [vmem:[%s879 + $0x8] sm:$0xff]
  %v883 = vsel %vm228, %v876, 0
  %885 = vmatprep.subr.mxu0 %v211
  %886 = vmatpush1.msra.mxu0 %v210
  %887 = vmatprep.subr.mxu0 %v213
  %888 = vmatpush1.msra.mxu0 %v212
  %889 = vmatprep.subr.mxu0 %v215
  %890 = vmatpush1.msra.mxu0 %v214
  %891 = vmatprep.subr.mxu0 %v217
  %892 = vmatpush1.msra.mxu0 %v216
  %893 = vmatprep.subr.mxu0 %v219
  %894 = vmatpush1.msra.mxu0 %v218
  %895 = vmatprep.subr.mxu0 %v221
  %896 = vmatpush1.msra.mxu0 %v220
  %897 = vmatprep.subr.mxu0 %v223
  %898 = vmatpush1.msra.mxu0 %v222
  %899 = vmatprep.subr.mxu0 %v225
  %900 = vmatpush1.msra.mxu0 %v224
  %901 = vmatprep.subr.mxu0 0.0
  %902 = vmatpush1.msra.mxu0 0.0
  %903 = vmatprep.subr.mxu0 0.0
  %904 = vmatpush1.msra.mxu0 0.0
  %905 = vmatprep.subr.mxu0 0.0
  %906 = vmatpush1.msra.mxu0 0.0
  %907 = vmatprep.subr.mxu0 0.0
  %908 = vmatpush1.msra.mxu0 0.0
  %909 = vmatprep.subr.mxu0 0.0
  %910 = vmatpush1.msra.mxu0 0.0
  %911 = vmatprep.subr.mxu0 0.0
  %912 = vmatpush1.msra.mxu0 0.0
  %913 = vmatprep.subr.mxu0 0.0
  %914 = vmatpush1.msra.mxu0 0.0
  %915 = vmatprep.subr.mxu0 0.0
  %916 = vmatpush1.msra.mxu0 0.0
  %917 = vmatprep.subr.mxu0 0.0
  %918 = vmatpush1.msra.mxu0 0.0
  %919 = vmatprep.subr.mxu0 0.0
  %920 = vmatpush1.msra.mxu0 0.0
  %921 = vmatprep.subr.mxu0 0.0
  %922 = vmatpush1.msra.mxu0 0.0
  %923 = vmatprep.subr.mxu0 0.0
  %924 = vmatpush1.msra.mxu0 0.0
  %925 = vmatprep.subr.mxu0 0.0
  %926 = vmatpush1.msra.mxu0 0.0
  %927 = vmatprep.subr.mxu0 0.0
  %928 = vmatpush1.msra.mxu0 0.0
  %929 = vmatprep.subr.mxu0 0.0
  %930 = vmatpush1.msra.mxu0 0.0
  %931 = vmatprep.subr.mxu0 0.0
  %932 = vmatpush1.msra.mxu0 0.0
  %933 = vmatprep.subr.mxu0 0.0
  %934 = vmatpush1.msra.mxu0 0.0
  %935 = vmatprep.subr.mxu0 0.0
  %936 = vmatpush1.msra.mxu0 0.0
  %937 = vmatprep.subr.mxu0 0.0
  %938 = vmatpush1.msra.mxu0 0.0
  %939 = vmatprep.subr.mxu0 0.0
  %940 = vmatpush1.msra.mxu0 0.0
  %941 = vmatprep.subr.mxu0 0.0
  %942 = vmatpush1.msra.mxu0 0.0
  %943 = vmatprep.subr.mxu0 0.0
  %944 = vmatpush1.msra.mxu0 0.0
  %945 = vmatprep.subr.mxu0 0.0
  %946 = vmatpush1.msra.mxu0 0.0
  %947 = vmatprep.subr.mxu0 0.0
  %948 = vmatpush1.msra.mxu0 0.0
  %949 = vmatprep.mubr.f32.mxu0 0.0
  %950 = vmatmul.mubr.f32.gmra.mrb[0].mxu0 %v883
  %v951 = vpop.f32.mrb[0].mxu0
  %v952 = vadd.f32 %v880, %v951
  %v953 = vpop.f32.mrb[0].mxu0
  %v954 = vadd.f32 %v881, %v953
  %955 = vdwg.mxu0
  %v956 = vxor.u32 %v952, 2147483648
  %v957 = vxor.u32 %v954, 2147483648
  %v958 = vmul.f32 %v956, 1.442695
  %v959 = vpow.pop %v958
  %v960 = vmul.f32 %v957, 1.442695
  %v961 = vpow.pop %v960
  %v962 = vadd.f32 %v959, 1.0
  %v963 = vadd.f32 %v961, 1.0
  %v964 = vrcp.pop %v962
  %v965 = vmul.f32 1.0, %v964
  %v966 = vrcp.pop %v963
  %v967 = vmul.f32 1.0, %v966
  %v968 = vtanh.pop %v954
  %v969 = vmul.f32 %v965, %v870
  %971 = vrot.lane.b32.xlu0 %v968, 64
  %v972 = vpop.permute.xlu0 %971
  %v974 = vmul.f32 %v965, %v972
  %976 = vrot.lane.b32.xlu0 %v974, 64
  %v977 = vpop.permute.xlu0 %976
  %v979 = vadd.f32 %v969, %v977
  %v980 = vtanh.pop %v979
  %982 = vrot.lane.b32.xlu0 %v980, 64
  %v983 = vpop.permute.xlu0 %982
  %v985 = vmul.f32 %v967, %v983
  %s986 = scalar_lea.vmem [#allocation3], 48
  %987 = vst.msk [vmem:[%s986] sm:$0xff] %vm228, %v985
  %s988 = scalar_lea.vmem [#allocation2], 112
  %v989 = vld [vmem:[%s988] sm:$0xff]
  %v990 = vld [vmem:[%s988 + $0x8] sm:$0xff]
  %v992 = vsel %vm228, %v985, 0
  %994 = vmatprep.subr.mxu0 %v211
  %995 = vmatpush1.msra.mxu0 %v210
  %996 = vmatprep.subr.mxu0 %v213
  %997 = vmatpush1.msra.mxu0 %v212
  %998 = vmatprep.subr.mxu0 %v215
  %999 = vmatpush1.msra.mxu0 %v214
  %1000 = vmatprep.subr.mxu0 %v217
  %1001 = vmatpush1.msra.mxu0 %v216
  %1002 = vmatprep.subr.mxu0 %v219
  %1003 = vmatpush1.msra.mxu0 %v218
  %1004 = vmatprep.subr.mxu0 %v221
  %1005 = vmatpush1.msra.mxu0 %v220
  %1006 = vmatprep.subr.mxu0 %v223
  %1007 = vmatpush1.msra.mxu0 %v222
  %1008 = vmatprep.subr.mxu0 %v225
  %1009 = vmatpush1.msra.mxu0 %v224
  %1010 = vmatprep.subr.mxu0 0.0
  %1011 = vmatpush1.msra.mxu0 0.0
  %1012 = vmatprep.subr.mxu0 0.0
  %1013 = vmatpush1.msra.mxu0 0.0
  %1014 = vmatprep.subr.mxu0 0.0
  %1015 = vmatpush1.msra.mxu0 0.0
  %1016 = vmatprep.subr.mxu0 0.0
  %1017 = vmatpush1.msra.mxu0 0.0
  %1018 = vmatprep.subr.mxu0 0.0
  %1019 = vmatpush1.msra.mxu0 0.0
  %1020 = vmatprep.subr.mxu0 0.0
  %1021 = vmatpush1.msra.mxu0 0.0
  %1022 = vmatprep.subr.mxu0 0.0
  %1023 = vmatpush1.msra.mxu0 0.0
  %1024 = vmatprep.subr.mxu0 0.0
  %1025 = vmatpush1.msra.mxu0 0.0
  %1026 = vmatprep.subr.mxu0 0.0
  %1027 = vmatpush1.msra.mxu0 0.0
  %1028 = vmatprep.subr.mxu0 0.0
  %1029 = vmatpush1.msra.mxu0 0.0
  %1030 = vmatprep.subr.mxu0 0.0
  %1031 = vmatpush1.msra.mxu0 0.0
  %1032 = vmatprep.subr.mxu0 0.0
  %1033 = vmatpush1.msra.mxu0 0.0
  %1034 = vmatprep.subr.mxu0 0.0
  %1035 = vmatpush1.msra.mxu0 0.0
  %1036 = vmatprep.subr.mxu0 0.0
  %1037 = vmatpush1.msra.mxu0 0.0
  %1038 = vmatprep.subr.mxu0 0.0
  %1039 = vmatpush1.msra.mxu0 0.0
  %1040 = vmatprep.subr.mxu0 0.0
  %1041 = vmatpush1.msra.mxu0 0.0
  %1042 = vmatprep.subr.mxu0 0.0
  %1043 = vmatpush1.msra.mxu0 0.0
  %1044 = vmatprep.subr.mxu0 0.0
  %1045 = vmatpush1.msra.mxu0 0.0
  %1046 = vmatprep.subr.mxu0 0.0
  %1047 = vmatpush1.msra.mxu0 0.0
  %1048 = vmatprep.subr.mxu0 0.0
  %1049 = vmatpush1.msra.mxu0 0.0
  %1050 = vmatprep.subr.mxu0 0.0
  %1051 = vmatpush1.msra.mxu0 0.0
  %1052 = vmatprep.subr.mxu0 0.0
  %1053 = vmatpush1.msra.mxu0 0.0
  %1054 = vmatprep.subr.mxu0 0.0
  %1055 = vmatpush1.msra.mxu0 0.0
  %1056 = vmatprep.subr.mxu0 0.0
  %1057 = vmatpush1.msra.mxu0 0.0
  %1058 = vmatprep.mubr.f32.mxu0 0.0
  %1059 = vmatmul.mubr.f32.gmra.mrb[0].mxu0 %v992
  %v1060 = vpop.f32.mrb[0].mxu0
  %v1061 = vadd.f32 %v989, %v1060
  %v1062 = vpop.f32.mrb[0].mxu0
  %v1063 = vadd.f32 %v990, %v1062
  %1064 = vdwg.mxu0
  %v1065 = vxor.u32 %v1061, 2147483648
  %v1066 = vxor.u32 %v1063, 2147483648
  %v1067 = vmul.f32 %v1065, 1.442695
  %v1068 = vpow.pop %v1067
  %v1069 = vmul.f32 %v1066, 1.442695
  %v1070 = vpow.pop %v1069
  %v1071 = vadd.f32 %v1068, 1.0
  %v1072 = vadd.f32 %v1070, 1.0
  %v1073 = vrcp.pop %v1071
  %v1074 = vmul.f32 1.0, %v1073
  %v1075 = vrcp.pop %v1072
  %v1076 = vmul.f32 1.0, %v1075
  %v1077 = vtanh.pop %v1063
  %v1078 = vmul.f32 %v1074, %v979
  %1080 = vrot.lane.b32.xlu0 %v1077, 64
  %v1081 = vpop.permute.xlu0 %1080
  %v1083 = vmul.f32 %v1074, %v1081
  %1085 = vrot.lane.b32.xlu0 %v1083, 64
  %v1086 = vpop.permute.xlu0 %1085
  %v1088 = vadd.f32 %v1078, %v1086
  %v1089 = vtanh.pop %v1088
  %1091 = vrot.lane.b32.xlu0 %v1089, 64
  %v1092 = vpop.permute.xlu0 %1091
  %v1094 = vmul.f32 %v1076, %v1092
  %s1095 = scalar_lea.vmem [#allocation3], 56
  %1096 = vst.msk [vmem:[%s1095] sm:$0xff] %vm228, %v1094
  %v1097 = vld [vmem:[%s4] sm:$0xff]
  %v1098 = vld [vmem:[%s4 + $0x8] sm:$0xff]
  %v1099 = vld [vmem:[%s4 + $0x10] sm:$0xff]
  %v1100 = vld [vmem:[%s4 + $0x18] sm:$0xff]
  %v1101 = vld [vmem:[%s4 + $0x20] sm:$0xff]
  %v1102 = vld [vmem:[%s4 + $0x28] sm:$0xff]
  %v1103 = vld [vmem:[%s4 + $0x30] sm:$0xff]
  %v1104 = vld [vmem:[%s4 + $0x38] sm:$0xff]
  %v1105 = vld [vmem:[%s5] sm:$0x1]
  %s1106 = scalar_lea.vmem [#allocation3], %s32
  %v1107 = vld [vmem:[%s1106] sm:$0xff]
  %v1108 = vld [vmem:[%s1106 + $0x8] sm:$0xff]
  %v1109 = vld [vmem:[%s1106 + $0x10] sm:$0xff]
  %v1110 = vld [vmem:[%s1106 + $0x18] sm:$0xff]
  %v1111 = vld [vmem:[%s1106 + $0x20] sm:$0xff]
  %v1112 = vld [vmem:[%s1106 + $0x28] sm:$0xff]
  %v1113 = vld [vmem:[%s1106 + $0x30] sm:$0xff]
  %v1114 = vld [vmem:[%s1106 + $0x38] sm:$0xff]
  %v1116 = vlaneseq
  %v1117 = vshrl.u32 %v1116, 7
  %v1118 = vsub.s32 0, %v1117
  %v1119 = vrot.slane %v1105, %v1118
  %v1122 = vsel %vm228, %v1107, 0
  %v1125 = vsel %vm228, %v1108, 0
  %v1128 = vsel %vm228, %v1109, 0
  %v1131 = vsel %vm228, %v1110, 0
  %v1134 = vsel %vm228, %v1111, 0
  %v1137 = vsel %vm228, %v1112, 0
  %v1140 = vsel %vm228, %v1113, 0
  %v1143 = vsel %vm228, %v1114, 0
  %1145 = vmatprep.subr.mxu0 0.0
  %1146 = vmatpush1.msra.mxu0 %v1097
  %1147 = vmatprep.subr.mxu0 0.0
  %1148 = vmatpush1.msra.mxu0 %v1098
  %1149 = vmatprep.subr.mxu0 0.0
  %1150 = vmatpush1.msra.mxu0 %v1099
  %1151 = vmatprep.subr.mxu0 0.0
  %1152 = vmatpush1.msra.mxu0 %v1100
  %1153 = vmatprep.subr.mxu0 0.0
  %1154 = vmatpush1.msra.mxu0 %v1101
  %1155 = vmatprep.subr.mxu0 0.0
  %1156 = vmatpush1.msra.mxu0 %v1102
  %1157 = vmatprep.subr.mxu0 0.0
  %1158 = vmatpush1.msra.mxu0 %v1103
  %1159 = vmatprep.subr.mxu0 0.0
  %1160 = vmatpush1.msra.mxu0 %v1104
  %1161 = vmatprep.subr.mxu0 0.0
  %1162 = vmatpush1.msra.mxu0 0.0
  %1163 = vmatprep.subr.mxu0 0.0
  %1164 = vmatpush1.msra.mxu0 0.0
  %1165 = vmatprep.subr.mxu0 0.0
  %1166 = vmatpush1.msra.mxu0 0.0
  %1167 = vmatprep.subr.mxu0 0.0
  %1168 = vmatpush1.msra.mxu0 0.0
  %1169 = vmatprep.subr.mxu0 0.0
  %1170 = vmatpush1.msra.mxu0 0.0
  %1171 = vmatprep.subr.mxu0 0.0
  %1172 = vmatpush1.msra.mxu0 0.0
  %1173 = vmatprep.subr.mxu0 0.0
  %1174 = vmatpush1.msra.mxu0 0.0
  %1175 = vmatprep.subr.mxu0 0.0
  %1176 = vmatpush1.msra.mxu0 0.0
  %1177 = vmatprep.subr.mxu0 0.0
  %1178 = vmatpush1.msra.mxu0 0.0
  %1179 = vmatprep.subr.mxu0 0.0
  %1180 = vmatpush1.msra.mxu0 0.0
  %1181 = vmatprep.subr.mxu0 0.0
  %1182 = vmatpush1.msra.mxu0 0.0
  %1183 = vmatprep.subr.mxu0 0.0
  %1184 = vmatpush1.msra.mxu0 0.0
  %1185 = vmatprep.subr.mxu0 0.0
  %1186 = vmatpush1.msra.mxu0 0.0
  %1187 = vmatprep.subr.mxu0 0.0
  %1188 = vmatpush1.msra.mxu0 0.0
  %1189 = vmatprep.subr.mxu0 0.0
  %1190 = vmatpush1.msra.mxu0 0.0
  %1191 = vmatprep.subr.mxu0 0.0
  %1192 = vmatpush1.msra.mxu0 0.0
  %1193 = vmatprep.subr.mxu0 0.0
  %1194 = vmatpush1.msra.mxu0 0.0
  %1195 = vmatprep.subr.mxu0 0.0
  %1196 = vmatpush1.msra.mxu0 0.0
  %1197 = vmatprep.subr.mxu0 0.0
  %1198 = vmatpush1.msra.mxu0 0.0
  %1199 = vmatprep.subr.mxu0 0.0
  %1200 = vmatpush1.msra.mxu0 0.0
  %1201 = vmatprep.subr.mxu0 0.0
  %1202 = vmatpush1.msra.mxu0 0.0
  %1203 = vmatprep.subr.mxu0 0.0
  %1204 = vmatpush1.msra.mxu0 0.0
  %1205 = vmatprep.subr.mxu0 0.0
  %1206 = vmatpush1.msra.mxu0 0.0
  %1207 = vmatprep.subr.mxu0 0.0
  %1208 = vmatpush1.msra.mxu0 0.0
  %1209 = vmatprep.mubr.f32.mxu0 0.0
  %1210 = vmatmul.mubr.f32.gmra.mrb[0].mxu0 %v1122
  %v1211 = vpop.f32.mrb[0].mxu0
  %v1212 = vadd.f32 %v1119, %v1211
  %v1213 = vpop.f32.mrb[0].mxu0
  %1214 = vmatprep.mubr.f32.mxu0 0.0
  %1215 = vmatmul.mubr.f32.gmra.mrb[0].mxu0 %v1125
  %v1216 = vpop.f32.mrb[0].mxu0
  %v1217 = vadd.f32 %v1119, %v1216
  %v1218 = vpop.f32.mrb[0].mxu0
  %1219 = vmatprep.mubr.f32.mxu0 0.0
  %1220 = vmatmul.mubr.f32.gmra.mrb[0].mxu0 %v1128
  %v1221 = vpop.f32.mrb[0].mxu0
  %v1222 = vadd.f32 %v1119, %v1221
  %v1223 = vpop.f32.mrb[0].mxu0
  %1224 = vmatprep.mubr.f32.mxu0 0.0
  %1225 = vmatmul.mubr.f32.gmra.mrb[0].mxu0 %v1131
  %v1226 = vpop.f32.mrb[0].mxu0
  %v1227 = vadd.f32 %v1119, %v1226
  %v1228 = vpop.f32.mrb[0].mxu0
  %1229 = vmatprep.mubr.f32.mxu0 0.0
  %1230 = vmatmul.mubr.f32.gmra.mrb[0].mxu0 %v1134
  %v1231 = vpop.f32.mrb[0].mxu0
  %v1232 = vadd.f32 %v1119, %v1231
  %v1233 = vpop.f32.mrb[0].mxu0
  %1234 = vmatprep.mubr.f32.mxu0 0.0
  %1235 = vmatmul.mubr.f32.gmra.mrb[0].mxu0 %v1137
  %v1236 = vpop.f32.mrb[0].mxu0
  %v1237 = vadd.f32 %v1119, %v1236
  %v1238 = vpop.f32.mrb[0].mxu0
  %1239 = vmatprep.mubr.f32.mxu0 0.0
  %1240 = vmatmul.mubr.f32.gmra.mrb[0].mxu0 %v1140
  %v1241 = vpop.f32.mrb[0].mxu0
  %v1242 = vadd.f32 %v1119, %v1241
  %v1243 = vpop.f32.mrb[0].mxu0
  %1244 = vmatprep.mubr.f32.mxu0 0.0
  %1245 = vmatmul.mubr.f32.gmra.mrb[0].mxu0 %v1143
  %v1246 = vpop.f32.mrb[0].mxu0
  %v1247 = vadd.f32 %v1119, %v1246
  %v1248 = vpop.f32.mrb[0].mxu0
  %1249 = vdwg.mxu0
  %s1250 = scalar_lea.vmem %s6, %s32
  %vm1251 = vcmask 31744
  %1252 = vst.msk [vmem:[%s1250] sm:$0xff] %vm1251, %v1212
  %1253 = vst.msk [vmem:[%s1250 + $0x8] sm:$0xff] %vm1251, %v1217
  %1254 = vst.msk [vmem:[%s1250 + $0x10] sm:$0xff] %vm1251, %v1222
  %1255 = vst.msk [vmem:[%s1250 + $0x18] sm:$0xff] %vm1251, %v1227
  %1256 = vst.msk [vmem:[%s1250 + $0x20] sm:$0xff] %vm1251, %v1232
  %1257 = vst.msk [vmem:[%s1250 + $0x28] sm:$0xff] %vm1251, %v1237
  %1258 = vst.msk [vmem:[%s1250 + $0x30] sm:$0xff] %vm1251, %v1242
  %1259 = vst.msk [vmem:[%s1250 + $0x38] sm:$0xff] %vm1251, %v1247
  // Predicated region
  $region26: #{split_word_forward.1} parent=0 // pred_check
    _
  $region27: #{split_word_forward.1} parent=0 // pred_check_branch
    %1261 = sbr.rel (0) target = $region29
  $region28: #{split_word_forward.1} parent=0 // pred_region
    _
  $region29: #{split_word_forward.1} parent=0 // pred_fallthru
    _
  // Predicated region
  $region30: #{split_word_forward.1} parent=0 // pred_check
    _
  $region31: #{split_word_forward.1} parent=0 // pred_check_branch
    %1263 = sbr.rel (0) target = $region33
  $region32: #{split_word_forward.1} parent=0 // pred_region
    _
  $region33: #{split_word_forward.1} parent=0 // pred_fallthru
    _

</llo_original>
